<compile_context>
chip_gen: v5e
topology: v5e:2x2
jax: 0.10.0
libtpu: 0.0.40
codegen_flags: <defaults>
</compile_context>

<pallas_src>
import functools

import jax
import jax.numpy as jnp
import numpy as np
from jax.experimental import pallas as pl
from jax.experimental.pallas import tpu as pltpu


def _im2patch_kernel(rs_ref, cs_ref, x_ref, o_ref, *, patch_size, ph, pw, tb):
    # rs_ref: (P*ph, H) 0/1 row-selection;  cs_ref: (W, P*pw) 0/1 column-selection
    # x_ref:  (TB, 1, H, W);                o_ref:  (TB, P*P, ph, pw)
    P = patch_size
    row_sel = rs_ref[...]
    col_sel = cs_ref[...]
    for t in range(tb):
        xt = x_ref[t, 0]                                             # (H, W)
        xa = jnp.dot(row_sel, xt,
                     preferred_element_type=jnp.float32,
                     precision=jax.lax.Precision.HIGHEST)            # (P*ph, W)
        z = jnp.dot(xa, col_sel,
                    preferred_element_type=jnp.float32,
                    precision=jax.lax.Precision.HIGHEST)             # (P*ph, P*pw)
        # z[i*ph + p, j*pw + q] = x[p*s + i, q*s + j]; scatter per (i, j) by addressing,
        # not by in-register relayout.
        for i in range(P):
            zi = z[i * ph:(i + 1) * ph, :]                           # (ph, P*pw)
            for j in range(P):
                o_ref[t, i * P + j] = zi[:, j * pw:(j + 1) * pw].astype(o_ref.dtype)


def _selection_matrices(patch_size, stride, ph, pw, H, W):
    P = patch_size
    row_sel = np.zeros((P * ph, H), np.float32)
    for i in range(P):
        for p in range(ph):
            row_sel[i * ph + p, p * stride + i] = 1.0
    col_sel = np.zeros((W, P * pw), np.float32)
    for j in range(P):
        for q in range(pw):
            col_sel[q * stride + j, j * pw + q] = 1.0
    return jnp.asarray(row_sel), jnp.asarray(col_sel)


def im2patch(x, patch_size, stride, img_size):
    B, C, H, W = x.shape
    assert C == 1 and H == img_size and W == img_size, "module assumes (B,1,S,S) input"
    P = patch_size
    ph = (img_size - P) // stride + 1
    pw = (img_size - P) // stride + 1

    # Batch blocking: largest divisor of B that is <= 8 images per grid step.
    tb = 1
    for d in range(min(B, 8), 0, -1):
        if B % d == 0:
            tb = d
            break

    row_sel, col_sel = _selection_matrices(P, stride, ph, pw, H, W)

    elt = jnp.dtype(x.dtype).itemsize
    block_bytes = ((tb * H * W + tb * P * P * ph * pw) * elt
                   + (row_sel.size + col_sel.size) * 4)
    vmem_limit = int(min(48 * 1024 * 1024, max(16 * 1024 * 1024, 6 * block_bytes)))

    flops = 2 * B * (P * ph * H * W + P * ph * W * P * pw)
    bytes_accessed = int(B * H * W * elt + B * P * P * ph * pw * elt)

    kernel = functools.partial(_im2patch_kernel, patch_size=P, ph=ph, pw=pw, tb=tb)
    out4 = pl.pallas_call(
        kernel,
        out_shape=jax.ShapeDtypeStruct((B, P * P, ph, pw), x.dtype),
        grid_spec=pltpu.PrefetchScalarGridSpec(
            num_scalar_prefetch=0,
            grid=(B // tb,),
            in_specs=[
                pl.BlockSpec((P * ph, H), lambda b: (0, 0)),
                pl.BlockSpec((W, P * pw), lambda b: (0, 0)),
                pl.BlockSpec((tb, 1, H, W), lambda b: (b, 0, 0, 0)),
            ],
            out_specs=pl.BlockSpec((tb, P * P, ph, pw), lambda b: (b, 0, 0, 0)),
        ),
        compiler_params=pltpu.CompilerParams(
            dimension_semantics=("parallel",),
            vmem_limit_bytes=vmem_limit,
        ),
        cost_estimate=pl.CostEstimate(
            flops=flops, transcendentals=0, bytes_accessed=bytes_accessed),
    )(row_sel, col_sel, x)

    # Kernel HBM layout is (B, P*P, ph*pw); one wrapper-side transpose to the module's
    # (B, Ph*Pw, P*P).  In a real pipeline fold this into the consumer's dot_general.
    return jnp.swapaxes(out4.reshape(B, P * P, ph * pw), 1, 2)


def im2patch_ref(x, patch_size, stride):
    """Pure-JAX reference mirroring the PyTorch img2patch + reshape."""
    B, C, H, W = x.shape
    Ph_full = H - patch_size + 1
    Pw_full = W - patch_size + 1
    y = jnp.stack(
        [
            jnp.stack(
                [x[..., i:i + Ph_full, j:j + Pw_full] for j in range(patch_size)],
                axis=-1,
            )
            for i in range(patch_size)
        ],
        axis=-2,
    )  # (B, C, Ph_full, Pw_full, P, P)
    y = y[..., ::stride, ::stride, :, :]
    ph = (H - patch_size) // stride + 1
    pw = (W - patch_size) // stride + 1
    return y.reshape(B, C * ph * pw, patch_size * patch_size)


if __name__ == "__main__":
    patch_size, stride, img_size = 4, 2, 16
    key = jax.random.PRNGKey(0)
    x = jax.random.normal(key, (2, 1, img_size, img_size), dtype=jnp.float32)

    out = im2patch(x, patch_size, stride, img_size)
    out = jax.block_until_ready(out)

    ref = im2patch_ref(x, patch_size, stride)
    np.testing.assert_allclose(np.asarray(out), np.asarray(ref), rtol=1e-5, atol=1e-5)
    print("KERNEL_OK")
</pallas_src>

<mosaic_0001>
module attributes {stable_mosaic.version = 11 : i64} {
  func.func @_im2patch_kernel(%arg0: i32, %arg1: memref<28x16xf32, #tpu.memory_space<vmem>>, %arg2: memref<16x28xf32, #tpu.memory_space<vmem>>, %arg3: memref<2x1x16x16xf32, #tpu.memory_space<vmem>>, %arg4: memref<2x16x7x7xf32, #tpu.memory_space<vmem>>) attributes {dimension_semantics = [#tpu.dimension_semantics<parallel>], iteration_bounds = array<i64: 1>, scalar_prefetch = 0 : i64, scratch_operands = 0 : i64, tpu.core_type = #tpu.core_type<tc>, window_params = [{pipeline_mode = #tpu.pipeline_mode<synchronous>, transform_indices = @transform_0, window_bounds = array<i64: 28, 16>}, {pipeline_mode = #tpu.pipeline_mode<synchronous>, transform_indices = @transform_1, window_bounds = array<i64: 16, 28>}, {transform_indices = @transform_2, window_bounds = array<i64: 2, 1, 16, 16>}, {transform_indices = @transform_3, window_bounds = array<i64: 2, 16, 7, 7>}]} {
    %c0 = arith.constant 0 : index
    %c0_0 = arith.constant 0 : index
    %0 = vector.load %arg1[%c0, %c0_0] : memref<28x16xf32, #tpu.memory_space<vmem>>, vector<28x16xf32>
    %c0_1 = arith.constant 0 : index
    %c0_2 = arith.constant 0 : index
    %1 = vector.load %arg2[%c0_1, %c0_2] : memref<16x28xf32, #tpu.memory_space<vmem>>, vector<16x28xf32>
    %c0_3 = arith.constant 0 : index
    %c0_4 = arith.constant 0 : index
    %c0_5 = arith.constant 0 : index
    %c0_6 = arith.constant 0 : index
    %2 = vector.load %arg3[%c0_3, %c0_4, %c0_5, %c0_6] : memref<2x1x16x16xf32, #tpu.memory_space<vmem>>, vector<1x1x16x16xf32>
    %3 = vector.shape_cast %2 : vector<1x1x16x16xf32> to vector<16x16xf32>
    %cst = arith.constant dense<0.000000e+00> : vector<28x16xf32>
    %4 = tpu.matmul %0, %3, %cst {dimension_numbers = #tpu.dot_dimension_numbers<[1], [0], [0], [1], [0, 0, 1, 1], [], []>, precision = #tpu.contract_precision<fp32>} : vector<28x16xf32>, vector<16x16xf32>, vector<28x16xf32> -> vector<28x16xf32>
    %cst_7 = arith.constant dense<0.000000e+00> : vector<28x28xf32>
    %5 = tpu.matmul %4, %1, %cst_7 {dimension_numbers = #tpu.dot_dimension_numbers<[1], [0], [0], [1], [0, 0, 1, 1], [], []>, precision = #tpu.contract_precision<fp32>} : vector<28x16xf32>, vector<16x28xf32>, vector<28x28xf32> -> vector<28x28xf32>
    %6 = vector.extract_strided_slice %5 {offsets = [0, 0], sizes = [7, 28], strides = [1, 1]} : vector<28x28xf32> to vector<7x28xf32>
    %7 = vector.extract_strided_slice %6 {offsets = [0, 0], sizes = [7, 7], strides = [1, 1]} : vector<7x28xf32> to vector<7x7xf32>
    %c0_8 = arith.constant 0 : index
    %c0_9 = arith.constant 0 : index
    %c0_10 = arith.constant 0 : index
    %c0_11 = arith.constant 0 : index
    %8 = vector.load %arg4[%c0_8, %c0_9, %c0_10, %c0_11] : memref<2x16x7x7xf32, #tpu.memory_space<vmem>>, vector<1x1x7x7xf32>
    %9 = vector.shape_cast %8 : vector<1x1x7x7xf32> to vector<7x7xf32>
    %10 = vector.shape_cast %7 : vector<7x7xf32> to vector<1x1x7x7xf32>
    tpu.vector_store %arg4[%c0_8, %c0_9, %c0_10, %c0_11], %10 {strides = array<i32>} : memref<2x16x7x7xf32, #tpu.memory_space<vmem>>, vector<1x1x7x7xf32>,
    %11 = vector.extract_strided_slice %6 {offsets = [0, 7], sizes = [7, 7], strides = [1, 1]} : vector<7x28xf32> to vector<7x7xf32>
    %c0_12 = arith.constant 0 : index
    %c1 = arith.constant 1 : index
    %c0_13 = arith.constant 0 : index
    %c0_14 = arith.constant 0 : index
    %12 = vector.load %arg4[%c0_12, %c1, %c0_13, %c0_14] : memref<2x16x7x7xf32, #tpu.memory_space<vmem>>, vector<1x1x7x7xf32>
    %13 = vector.shape_cast %12 : vector<1x1x7x7xf32> to vector<7x7xf32>
    %14 = vector.shape_cast %11 : vector<7x7xf32> to vector<1x1x7x7xf32>
    tpu.vector_store %arg4[%c0_12, %c1, %c0_13, %c0_14], %14 {strides = array<i32>} : memref<2x16x7x7xf32, #tpu.memory_space<vmem>>, vector<1x1x7x7xf32>,
    %15 = vector.extract_strided_slice %6 {offsets = [0, 14], sizes = [7, 7], strides = [1, 1]} : vector<7x28xf32> to vector<7x7xf32>
    %c0_15 = arith.constant 0 : index
    %c2 = arith.constant 2 : index
    %c0_16 = arith.constant 0 : index
    %c0_17 = arith.constant 0 : index
    %16 = vector.load %arg4[%c0_15, %c2, %c0_16, %c0_17] : memref<2x16x7x7xf32, #tpu.memory_space<vmem>>, vector<1x1x7x7xf32>
    %17 = vector.shape_cast %16 : vector<1x1x7x7xf32> to vector<7x7xf32>
    %18 = vector.shape_cast %15 : vector<7x7xf32> to vector<1x1x7x7xf32>
    tpu.vector_store %arg4[%c0_15, %c2, %c0_16, %c0_17], %18 {strides = array<i32>} : memref<2x16x7x7xf32, #tpu.memory_space<vmem>>, vector<1x1x7x7xf32>,
    %19 = vector.extract_strided_slice %6 {offsets = [0, 21], sizes = [7, 7], strides = [1, 1]} : vector<7x28xf32> to vector<7x7xf32>
    %c0_18 = arith.constant 0 : index
    %c3 = arith.constant 3 : index
    %c0_19 = arith.constant 0 : index
    %c0_20 = arith.constant 0 : index
    %20 = vector.load %arg4[%c0_18, %c3, %c0_19, %c0_20] : memref<2x16x7x7xf32, #tpu.memory_space<vmem>>, vector<1x1x7x7xf32>
    %21 = vector.shape_cast %20 : vector<1x1x7x7xf32> to vector<7x7xf32>
    %22 = vector.shape_cast %19 : vector<7x7xf32> to vector<1x1x7x7xf32>
    tpu.vector_store %arg4[%c0_18, %c3, %c0_19, %c0_20], %22 {strides = array<i32>} : memref<2x16x7x7xf32, #tpu.memory_space<vmem>>, vector<1x1x7x7xf32>,
    %23 = vector.extract_strided_slice %5 {offsets = [7, 0], sizes = [7, 28], strides = [1, 1]} : vector<28x28xf32> to vector<7x28xf32>
    %24 = vector.extract_strided_slice %23 {offsets = [0, 0], sizes = [7, 7], strides = [1, 1]} : vector<7x28xf32> to vector<7x7xf32>
    %c0_21 = arith.constant 0 : index
    %c4 = arith.constant 4 : index
    %c0_22 = arith.constant 0 : index
    %c0_23 = arith.constant 0 : index
    %25 = vector.load %arg4[%c0_21, %c4, %c0_22, %c0_23] : memref<2x16x7x7xf32, #tpu.memory_space<vmem>>, vector<1x1x7x7xf32>
    %26 = vector.shape_cast %25 : vector<1x1x7x7xf32> to vector<7x7xf32>
    %27 = vector.shape_cast %24 : vector<7x7xf32> to vector<1x1x7x7xf32>
    tpu.vector_store %arg4[%c0_21, %c4, %c0_22, %c0_23], %27 {strides = array<i32>} : memref<2x16x7x7xf32, #tpu.memory_space<vmem>>, vector<1x1x7x7xf32>,
    %28 = vector.extract_strided_slice %23 {offsets = [0, 7], sizes = [7, 7], strides = [1, 1]} : vector<7x28xf32> to vector<7x7xf32>
    %c0_24 = arith.constant 0 : index
    %c5 = arith.constant 5 : index
    %c0_25 = arith.constant 0 : index
    %c0_26 = arith.constant 0 : index
    %29 = vector.load %arg4[%c0_24, %c5, %c0_25, %c0_26] : memref<2x16x7x7xf32, #tpu.memory_space<vmem>>, vector<1x1x7x7xf32>
    %30 = vector.shape_cast %29 : vector<1x1x7x7xf32> to vector<7x7xf32>
    %31 = vector.shape_cast %28 : vector<7x7xf32> to vector<1x1x7x7xf32>
    tpu.vector_store %arg4[%c0_24, %c5, %c0_25, %c0_26], %31 {strides = array<i32>} : memref<2x16x7x7xf32, #tpu.memory_space<vmem>>, vector<1x1x7x7xf32>,
    %32 = vector.extract_strided_slice %23 {offsets = [0, 14], sizes = [7, 7], strides = [1, 1]} : vector<7x28xf32> to vector<7x7xf32>
    %c0_27 = arith.constant 0 : index
    %c6 = arith.constant 6 : index
    %c0_28 = arith.constant 0 : index
    %c0_29 = arith.constant 0 : index
    %33 = vector.load %arg4[%c0_27, %c6, %c0_28, %c0_29] : memref<2x16x7x7xf32, #tpu.memory_space<vmem>>, vector<1x1x7x7xf32>
    %34 = vector.shape_cast %33 : vector<1x1x7x7xf32> to vector<7x7xf32>
    %35 = vector.shape_cast %32 : vector<7x7xf32> to vector<1x1x7x7xf32>
    tpu.vector_store %arg4[%c0_27, %c6, %c0_28, %c0_29], %35 {strides = array<i32>} : memref<2x16x7x7xf32, #tpu.memory_space<vmem>>, vector<1x1x7x7xf32>,
    %36 = vector.extract_strided_slice %23 {offsets = [0, 21], sizes = [7, 7], strides = [1, 1]} : vector<7x28xf32> to vector<7x7xf32>
    %c0_30 = arith.constant 0 : index
    %c7 = arith.constant 7 : index
    %c0_31 = arith.constant 0 : index
    %c0_32 = arith.constant 0 : index
    %37 = vector.load %arg4[%c0_30, %c7, %c0_31, %c0_32] : memref<2x16x7x7xf32, #tpu.memory_space<vmem>>, vector<1x1x7x7xf32>
    %38 = vector.shape_cast %37 : vector<1x1x7x7xf32> to vector<7x7xf32>
    %39 = vector.shape_cast %36 : vector<7x7xf32> to vector<1x1x7x7xf32>
    tpu.vector_store %arg4[%c0_30, %c7, %c0_31, %c0_32], %39 {strides = array<i32>} : memref<2x16x7x7xf32, #tpu.memory_space<vmem>>, vector<1x1x7x7xf32>,
    %40 = vector.extract_strided_slice %5 {offsets = [14, 0], sizes = [7, 28], strides = [1, 1]} : vector<28x28xf32> to vector<7x28xf32>
    %41 = vector.extract_strided_slice %40 {offsets = [0, 0], sizes = [7, 7], strides = [1, 1]} : vector<7x28xf32> to vector<7x7xf32>
    %c0_33 = arith.constant 0 : index
    %c8 = arith.constant 8 : index
    %c0_34 = arith.constant 0 : index
    %c0_35 = arith.constant 0 : index
    %42 = vector.load %arg4[%c0_33, %c8, %c0_34, %c0_35] : memref<2x16x7x7xf32, #tpu.memory_space<vmem>>, vector<1x1x7x7xf32>
    %43 = vector.shape_cast %42 : vector<1x1x7x7xf32> to vector<7x7xf32>
    %44 = vector.shape_cast %41 : vector<7x7xf32> to vector<1x1x7x7xf32>
    tpu.vector_store %arg4[%c0_33, %c8, %c0_34, %c0_35], %44 {strides = array<i32>} : memref<2x16x7x7xf32, #tpu.memory_space<vmem>>, vector<1x1x7x7xf32>,
    %45 = vector.extract_strided_slice %40 {offsets = [0, 7], sizes = [7, 7], strides = [1, 1]} : vector<7x28xf32> to vector<7x7xf32>
    %c0_36 = arith.constant 0 : index
    %c9 = arith.constant 9 : index
    %c0_37 = arith.constant 0 : index
    %c0_38 = arith.constant 0 : index
    %46 = vector.load %arg4[%c0_36, %c9, %c0_37, %c0_38] : memref<2x16x7x7xf32, #tpu.memory_space<vmem>>, vector<1x1x7x7xf32>
    %47 = vector.shape_cast %46 : vector<1x1x7x7xf32> to vector<7x7xf32>
    %48 = vector.shape_cast %45 : vector<7x7xf32> to vector<1x1x7x7xf32>
    tpu.vector_store %arg4[%c0_36, %c9, %c0_37, %c0_38], %48 {strides = array<i32>} : memref<2x16x7x7xf32, #tpu.memory_space<vmem>>, vector<1x1x7x7xf32>,
    %49 = vector.extract_strided_slice %40 {offsets = [0, 14], sizes = [7, 7], strides = [1, 1]} : vector<7x28xf32> to vector<7x7xf32>
    %c0_39 = arith.constant 0 : index
    %c10 = arith.constant 10 : index
    %c0_40 = arith.constant 0 : index
    %c0_41 = arith.constant 0 : index
    %50 = vector.load %arg4[%c0_39, %c10, %c0_40, %c0_41] : memref<2x16x7x7xf32, #tpu.memory_space<vmem>>, vector<1x1x7x7xf32>
    %51 = vector.shape_cast %50 : vector<1x1x7x7xf32> to vector<7x7xf32>
    %52 = vector.shape_cast %49 : vector<7x7xf32> to vector<1x1x7x7xf32>
    tpu.vector_store %arg4[%c0_39, %c10, %c0_40, %c0_41], %52 {strides = array<i32>} : memref<2x16x7x7xf32, #tpu.memory_space<vmem>>, vector<1x1x7x7xf32>,
    %53 = vector.extract_strided_slice %40 {offsets = [0, 21], sizes = [7, 7], strides = [1, 1]} : vector<7x28xf32> to vector<7x7xf32>
    %c0_42 = arith.constant 0 : index
    %c11 = arith.constant 11 : index
    %c0_43 = arith.constant 0 : index
    %c0_44 = arith.constant 0 : index
    %54 = vector.load %arg4[%c0_42, %c11, %c0_43, %c0_44] : memref<2x16x7x7xf32, #tpu.memory_space<vmem>>, vector<1x1x7x7xf32>
    %55 = vector.shape_cast %54 : vector<1x1x7x7xf32> to vector<7x7xf32>
    %56 = vector.shape_cast %53 : vector<7x7xf32> to vector<1x1x7x7xf32>
    tpu.vector_store %arg4[%c0_42, %c11, %c0_43, %c0_44], %56 {strides = array<i32>} : memref<2x16x7x7xf32, #tpu.memory_space<vmem>>, vector<1x1x7x7xf32>,
    %57 = vector.extract_strided_slice %5 {offsets = [21, 0], sizes = [7, 28], strides = [1, 1]} : vector<28x28xf32> to vector<7x28xf32>
    %58 = vector.extract_strided_slice %57 {offsets = [0, 0], sizes = [7, 7], strides = [1, 1]} : vector<7x28xf32> to vector<7x7xf32>
    %c0_45 = arith.constant 0 : index
    %c12 = arith.constant 12 : index
    %c0_46 = arith.constant 0 : index
    %c0_47 = arith.constant 0 : index
    %59 = vector.load %arg4[%c0_45, %c12, %c0_46, %c0_47] : memref<2x16x7x7xf32, #tpu.memory_space<vmem>>, vector<1x1x7x7xf32>
    %60 = vector.shape_cast %59 : vector<1x1x7x7xf32> to vector<7x7xf32>
    %61 = vector.shape_cast %58 : vector<7x7xf32> to vector<1x1x7x7xf32>
    tpu.vector_store %arg4[%c0_45, %c12, %c0_46, %c0_47], %61 {strides = array<i32>} : memref<2x16x7x7xf32, #tpu.memory_space<vmem>>, vector<1x1x7x7xf32>,
    %62 = vector.extract_strided_slice %57 {offsets = [0, 7], sizes = [7, 7], strides = [1, 1]} : vector<7x28xf32> to vector<7x7xf32>
    %c0_48 = arith.constant 0 : index
    %c13 = arith.constant 13 : index
    %c0_49 = arith.constant 0 : index
    %c0_50 = arith.constant 0 : index
    %63 = vector.load %arg4[%c0_48, %c13, %c0_49, %c0_50] : memref<2x16x7x7xf32, #tpu.memory_space<vmem>>, vector<1x1x7x7xf32>
    %64 = vector.shape_cast %63 : vector<1x1x7x7xf32> to vector<7x7xf32>
    %65 = vector.shape_cast %62 : vector<7x7xf32> to vector<1x1x7x7xf32>
    tpu.vector_store %arg4[%c0_48, %c13, %c0_49, %c0_50], %65 {strides = array<i32>} : memref<2x16x7x7xf32, #tpu.memory_space<vmem>>, vector<1x1x7x7xf32>,
    %66 = vector.extract_strided_slice %57 {offsets = [0, 14], sizes = [7, 7], strides = [1, 1]} : vector<7x28xf32> to vector<7x7xf32>
    %c0_51 = arith.constant 0 : index
    %c14 = arith.constant 14 : index
    %c0_52 = arith.constant 0 : index
    %c0_53 = arith.constant 0 : index
    %67 = vector.load %arg4[%c0_51, %c14, %c0_52, %c0_53] : memref<2x16x7x7xf32, #tpu.memory_space<vmem>>, vector<1x1x7x7xf32>
    %68 = vector.shape_cast %67 : vector<1x1x7x7xf32> to vector<7x7xf32>
    %69 = vector.shape_cast %66 : vector<7x7xf32> to vector<1x1x7x7xf32>
    tpu.vector_store %arg4[%c0_51, %c14, %c0_52, %c0_53], %69 {strides = array<i32>} : memref<2x16x7x7xf32, #tpu.memory_space<vmem>>, vector<1x1x7x7xf32>,
    %70 = vector.extract_strided_slice %57 {offsets = [0, 21], sizes = [7, 7], strides = [1, 1]} : vector<7x28xf32> to vector<7x7xf32>
    %c0_54 = arith.constant 0 : index
    %c15 = arith.constant 15 : index
    %c0_55 = arith.constant 0 : index
    %c0_56 = arith.constant 0 : index
    %71 = vector.load %arg4[%c0_54, %c15, %c0_55, %c0_56] : memref<2x16x7x7xf32, #tpu.memory_space<vmem>>, vector<1x1x7x7xf32>
    %72 = vector.shape_cast %71 : vector<1x1x7x7xf32> to vector<7x7xf32>
    %73 = vector.shape_cast %70 : vector<7x7xf32> to vector<1x1x7x7xf32>
    tpu.vector_store %arg4[%c0_54, %c15, %c0_55, %c0_56], %73 {strides = array<i32>} : memref<2x16x7x7xf32, #tpu.memory_space<vmem>>, vector<1x1x7x7xf32>,
    %c1_57 = arith.constant 1 : index
    %c0_58 = arith.constant 0 : index
    %c0_59 = arith.constant 0 : index
    %c0_60 = arith.constant 0 : index
    %74 = vector.load %arg3[%c1_57, %c0_58, %c0_59, %c0_60] : memref<2x1x16x16xf32, #tpu.memory_space<vmem>>, vector<1x1x16x16xf32>
    %75 = vector.shape_cast %74 : vector<1x1x16x16xf32> to vector<16x16xf32>
    %cst_61 = arith.constant dense<0.000000e+00> : vector<28x16xf32>
    %76 = tpu.matmul %0, %75, %cst_61 {dimension_numbers = #tpu.dot_dimension_numbers<[1], [0], [0], [1], [0, 0, 1, 1], [], []>, precision = #tpu.contract_precision<fp32>} : vector<28x16xf32>, vector<16x16xf32>, vector<28x16xf32> -> vector<28x16xf32>
    %cst_62 = arith.constant dense<0.000000e+00> : vector<28x28xf32>
    %77 = tpu.matmul %76, %1, %cst_62 {dimension_numbers = #tpu.dot_dimension_numbers<[1], [0], [0], [1], [0, 0, 1, 1], [], []>, precision = #tpu.contract_precision<fp32>} : vector<28x16xf32>, vector<16x28xf32>, vector<28x28xf32> -> vector<28x28xf32>
    %78 = vector.extract_strided_slice %77 {offsets = [0, 0], sizes = [7, 28], strides = [1, 1]} : vector<28x28xf32> to vector<7x28xf32>
    %79 = vector.extract_strided_slice %78 {offsets = [0, 0], sizes = [7, 7], strides = [1, 1]} : vector<7x28xf32> to vector<7x7xf32>
    %c1_63 = arith.constant 1 : index
    %c0_64 = arith.constant 0 : index
    %c0_65 = arith.constant 0 : index
    %c0_66 = arith.constant 0 : index
    %80 = vector.load %arg4[%c1_63, %c0_64, %c0_65, %c0_66] : memref<2x16x7x7xf32, #tpu.memory_space<vmem>>, vector<1x1x7x7xf32>
    %81 = vector.shape_cast %80 : vector<1x1x7x7xf32> to vector<7x7xf32>
    %82 = vector.shape_cast %79 : vector<7x7xf32> to vector<1x1x7x7xf32>
    tpu.vector_store %arg4[%c1_63, %c0_64, %c0_65, %c0_66], %82 {strides = array<i32>} : memref<2x16x7x7xf32, #tpu.memory_space<vmem>>, vector<1x1x7x7xf32>,
    %83 = vector.extract_strided_slice %78 {offsets = [0, 7], sizes = [7, 7], strides = [1, 1]} : vector<7x28xf32> to vector<7x7xf32>
    %c1_67 = arith.constant 1 : index
    %c1_68 = arith.constant 1 : index
    %c0_69 = arith.constant 0 : index
    %c0_70 = arith.constant 0 : index
    %84 = vector.load %arg4[%c1_67, %c1_68, %c0_69, %c0_70] : memref<2x16x7x7xf32, #tpu.memory_space<vmem>>, vector<1x1x7x7xf32>
    %85 = vector.shape_cast %84 : vector<1x1x7x7xf32> to vector<7x7xf32>
    %86 = vector.shape_cast %83 : vector<7x7xf32> to vector<1x1x7x7xf32>
    tpu.vector_store %arg4[%c1_67, %c1_68, %c0_69, %c0_70], %86 {strides = array<i32>} : memref<2x16x7x7xf32, #tpu.memory_space<vmem>>, vector<1x1x7x7xf32>,
    %87 = vector.extract_strided_slice %78 {offsets = [0, 14], sizes = [7, 7], strides = [1, 1]} : vector<7x28xf32> to vector<7x7xf32>
    %c1_71 = arith.constant 1 : index
    %c2_72 = arith.constant 2 : index
    %c0_73 = arith.constant 0 : index
    %c0_74 = arith.constant 0 : index
    %88 = vector.load %arg4[%c1_71, %c2_72, %c0_73, %c0_74] : memref<2x16x7x7xf32, #tpu.memory_space<vmem>>, vector<1x1x7x7xf32>
    %89 = vector.shape_cast %88 : vector<1x1x7x7xf32> to vector<7x7xf32>
    %90 = vector.shape_cast %87 : vector<7x7xf32> to vector<1x1x7x7xf32>
    tpu.vector_store %arg4[%c1_71, %c2_72, %c0_73, %c0_74], %90 {strides = array<i32>} : memref<2x16x7x7xf32, #tpu.memory_space<vmem>>, vector<1x1x7x7xf32>,
    %91 = vector.extract_strided_slice %78 {offsets = [0, 21], sizes = [7, 7], strides = [1, 1]} : vector<7x28xf32> to vector<7x7xf32>
    %c1_75 = arith.constant 1 : index
    %c3_76 = arith.constant 3 : index
    %c0_77 = arith.constant 0 : index
    %c0_78 = arith.constant 0 : index
    %92 = vector.load %arg4[%c1_75, %c3_76, %c0_77, %c0_78] : memref<2x16x7x7xf32, #tpu.memory_space<vmem>>, vector<1x1x7x7xf32>
    %93 = vector.shape_cast %92 : vector<1x1x7x7xf32> to vector<7x7xf32>
    %94 = vector.shape_cast %91 : vector<7x7xf32> to vector<1x1x7x7xf32>
    tpu.vector_store %arg4[%c1_75, %c3_76, %c0_77, %c0_78], %94 {strides = array<i32>} : memref<2x16x7x7xf32, #tpu.memory_space<vmem>>, vector<1x1x7x7xf32>,
    %95 = vector.extract_strided_slice %77 {offsets = [7, 0], sizes = [7, 28], strides = [1, 1]} : vector<28x28xf32> to vector<7x28xf32>
    %96 = vector.extract_strided_slice %95 {offsets = [0, 0], sizes = [7, 7], strides = [1, 1]} : vector<7x28xf32> to vector<7x7xf32>
    %c1_79 = arith.constant 1 : index
    %c4_80 = arith.constant 4 : index
    %c0_81 = arith.constant 0 : index
    %c0_82 = arith.constant 0 : index
    %97 = vector.load %arg4[%c1_79, %c4_80, %c0_81, %c0_82] : memref<2x16x7x7xf32, #tpu.memory_space<vmem>>, vector<1x1x7x7xf32>
    %98 = vector.shape_cast %97 : vector<1x1x7x7xf32> to vector<7x7xf32>
    %99 = vector.shape_cast %96 : vector<7x7xf32> to vector<1x1x7x7xf32>
    tpu.vector_store %arg4[%c1_79, %c4_80, %c0_81, %c0_82], %99 {strides = array<i32>} : memref<2x16x7x7xf32, #tpu.memory_space<vmem>>, vector<1x1x7x7xf32>,
    %100 = vector.extract_strided_slice %95 {offsets = [0, 7], sizes = [7, 7], strides = [1, 1]} : vector<7x28xf32> to vector<7x7xf32>
    %c1_83 = arith.constant 1 : index
    %c5_84 = arith.constant 5 : index
    %c0_85 = arith.constant 0 : index
    %c0_86 = arith.constant 0 : index
    %101 = vector.load %arg4[%c1_83, %c5_84, %c0_85, %c0_86] : memref<2x16x7x7xf32, #tpu.memory_space<vmem>>, vector<1x1x7x7xf32>
    %102 = vector.shape_cast %101 : vector<1x1x7x7xf32> to vector<7x7xf32>
    %103 = vector.shape_cast %100 : vector<7x7xf32> to vector<1x1x7x7xf32>
    tpu.vector_store %arg4[%c1_83, %c5_84, %c0_85, %c0_86], %103 {strides = array<i32>} : memref<2x16x7x7xf32, #tpu.memory_space<vmem>>, vector<1x1x7x7xf32>,
    %104 = vector.extract_strided_slice %95 {offsets = [0, 14], sizes = [7, 7], strides = [1, 1]} : vector<7x28xf32> to vector<7x7xf32>
    %c1_87 = arith.constant 1 : index
    %c6_88 = arith.constant 6 : index
    %c0_89 = arith.constant 0 : index
    %c0_90 = arith.constant 0 : index
    %105 = vector.load %arg4[%c1_87, %c6_88, %c0_89, %c0_90] : memref<2x16x7x7xf32, #tpu.memory_space<vmem>>, vector<1x1x7x7xf32>
    %106 = vector.shape_cast %105 : vector<1x1x7x7xf32> to vector<7x7xf32>
    %107 = vector.shape_cast %104 : vector<7x7xf32> to vector<1x1x7x7xf32>
    tpu.vector_store %arg4[%c1_87, %c6_88, %c0_89, %c0_90], %107 {strides = array<i32>} : memref<2x16x7x7xf32, #tpu.memory_space<vmem>>, vector<1x1x7x7xf32>,
    %108 = vector.extract_strided_slice %95 {offsets = [0, 21], sizes = [7, 7], strides = [1, 1]} : vector<7x28xf32> to vector<7x7xf32>
    %c1_91 = arith.constant 1 : index
    %c7_92 = arith.constant 7 : index
    %c0_93 = arith.constant 0 : index
    %c0_94 = arith.constant 0 : index
    %109 = vector.load %arg4[%c1_91, %c7_92, %c0_93, %c0_94] : memref<2x16x7x7xf32, #tpu.memory_space<vmem>>, vector<1x1x7x7xf32>
    %110 = vector.shape_cast %109 : vector<1x1x7x7xf32> to vector<7x7xf32>
    %111 = vector.shape_cast %108 : vector<7x7xf32> to vector<1x1x7x7xf32>
    tpu.vector_store %arg4[%c1_91, %c7_92, %c0_93, %c0_94], %111 {strides = array<i32>} : memref<2x16x7x7xf32, #tpu.memory_space<vmem>>, vector<1x1x7x7xf32>,
    %112 = vector.extract_strided_slice %77 {offsets = [14, 0], sizes = [7, 28], strides = [1, 1]} : vector<28x28xf32> to vector<7x28xf32>
    %113 = vector.extract_strided_slice %112 {offsets = [0, 0], sizes = [7, 7], strides = [1, 1]} : vector<7x28xf32> to vector<7x7xf32>
    %c1_95 = arith.constant 1 : index
    %c8_96 = arith.constant 8 : index
    %c0_97 = arith.constant 0 : index
    %c0_98 = arith.constant 0 : index
    %114 = vector.load %arg4[%c1_95, %c8_96, %c0_97, %c0_98] : memref<2x16x7x7xf32, #tpu.memory_space<vmem>>, vector<1x1x7x7xf32>
    %115 = vector.shape_cast %114 : vector<1x1x7x7xf32> to vector<7x7xf32>
    %116 = vector.shape_cast %113 : vector<7x7xf32> to vector<1x1x7x7xf32>
    tpu.vector_store %arg4[%c1_95, %c8_96, %c0_97, %c0_98], %116 {strides = array<i32>} : memref<2x16x7x7xf32, #tpu.memory_space<vmem>>, vector<1x1x7x7xf32>,
    %117 = vector.extract_strided_slice %112 {offsets = [0, 7], sizes = [7, 7], strides = [1, 1]} : vector<7x28xf32> to vector<7x7xf32>
    %c1_99 = arith.constant 1 : index
    %c9_100 = arith.constant 9 : index
    %c0_101 = arith.constant 0 : index
    %c0_102 = arith.constant 0 : index
    %118 = vector.load %arg4[%c1_99, %c9_100, %c0_101, %c0_102] : memref<2x16x7x7xf32, #tpu.memory_space<vmem>>, vector<1x1x7x7xf32>
    %119 = vector.shape_cast %118 : vector<1x1x7x7xf32> to vector<7x7xf32>
    %120 = vector.shape_cast %117 : vector<7x7xf32> to vector<1x1x7x7xf32>
    tpu.vector_store %arg4[%c1_99, %c9_100, %c0_101, %c0_102], %120 {strides = array<i32>} : memref<2x16x7x7xf32, #tpu.memory_space<vmem>>, vector<1x1x7x7xf32>,
    %121 = vector.extract_strided_slice %112 {offsets = [0, 14], sizes = [7, 7], strides = [1, 1]} : vector<7x28xf32> to vector<7x7xf32>
    %c1_103 = arith.constant 1 : index
    %c10_104 = arith.constant 10 : index
    %c0_105 = arith.constant 0 : index
    %c0_106 = arith.constant 0 : index
    %122 = vector.load %arg4[%c1_103, %c10_104, %c0_105, %c0_106] : memref<2x16x7x7xf32, #tpu.memory_space<vmem>>, vector<1x1x7x7xf32>
    %123 = vector.shape_cast %122 : vector<1x1x7x7xf32> to vector<7x7xf32>
    %124 = vector.shape_cast %121 : vector<7x7xf32> to vector<1x1x7x7xf32>
    tpu.vector_store %arg4[%c1_103, %c10_104, %c0_105, %c0_106], %124 {strides = array<i32>} : memref<2x16x7x7xf32, #tpu.memory_space<vmem>>, vector<1x1x7x7xf32>,
    %125 = vector.extract_strided_slice %112 {offsets = [0, 21], sizes = [7, 7], strides = [1, 1]} : vector<7x28xf32> to vector<7x7xf32>
    %c1_107 = arith.constant 1 : index
    %c11_108 = arith.constant 11 : index
    %c0_109 = arith.constant 0 : index
    %c0_110 = arith.constant 0 : index
    %126 = vector.load %arg4[%c1_107, %c11_108, %c0_109, %c0_110] : memref<2x16x7x7xf32, #tpu.memory_space<vmem>>, vector<1x1x7x7xf32>
    %127 = vector.shape_cast %126 : vector<1x1x7x7xf32> to vector<7x7xf32>
    %128 = vector.shape_cast %125 : vector<7x7xf32> to vector<1x1x7x7xf32>
    tpu.vector_store %arg4[%c1_107, %c11_108, %c0_109, %c0_110], %128 {strides = array<i32>} : memref<2x16x7x7xf32, #tpu.memory_space<vmem>>, vector<1x1x7x7xf32>,
    %129 = vector.extract_strided_slice %77 {offsets = [21, 0], sizes = [7, 28], strides = [1, 1]} : vector<28x28xf32> to vector<7x28xf32>
    %130 = vector.extract_strided_slice %129 {offsets = [0, 0], sizes = [7, 7], strides = [1, 1]} : vector<7x28xf32> to vector<7x7xf32>
    %c1_111 = arith.constant 1 : index
    %c12_112 = arith.constant 12 : index
    %c0_113 = arith.constant 0 : index
    %c0_114 = arith.constant 0 : index
    %131 = vector.load %arg4[%c1_111, %c12_112, %c0_113, %c0_114] : memref<2x16x7x7xf32, #tpu.memory_space<vmem>>, vector<1x1x7x7xf32>
    %132 = vector.shape_cast %131 : vector<1x1x7x7xf32> to vector<7x7xf32>
    %133 = vector.shape_cast %130 : vector<7x7xf32> to vector<1x1x7x7xf32>
    tpu.vector_store %arg4[%c1_111, %c12_112, %c0_113, %c0_114], %133 {strides = array<i32>} : memref<2x16x7x7xf32, #tpu.memory_space<vmem>>, vector<1x1x7x7xf32>,
    %134 = vector.extract_strided_slice %129 {offsets = [0, 7], sizes = [7, 7], strides = [1, 1]} : vector<7x28xf32> to vector<7x7xf32>
    %c1_115 = arith.constant 1 : index
    %c13_116 = arith.constant 13 : index
    %c0_117 = arith.constant 0 : index
    %c0_118 = arith.constant 0 : index
    %135 = vector.load %arg4[%c1_115, %c13_116, %c0_117, %c0_118] : memref<2x16x7x7xf32, #tpu.memory_space<vmem>>, vector<1x1x7x7xf32>
    %136 = vector.shape_cast %135 : vector<1x1x7x7xf32> to vector<7x7xf32>
    %137 = vector.shape_cast %134 : vector<7x7xf32> to vector<1x1x7x7xf32>
    tpu.vector_store %arg4[%c1_115, %c13_116, %c0_117, %c0_118], %137 {strides = array<i32>} : memref<2x16x7x7xf32, #tpu.memory_space<vmem>>, vector<1x1x7x7xf32>,
    %138 = vector.extract_strided_slice %129 {offsets = [0, 14], sizes = [7, 7], strides = [1, 1]} : vector<7x28xf32> to vector<7x7xf32>
    %c1_119 = arith.constant 1 : index
    %c14_120 = arith.constant 14 : index
    %c0_121 = arith.constant 0 : index
    %c0_122 = arith.constant 0 : index
    %139 = vector.load %arg4[%c1_119, %c14_120, %c0_121, %c0_122] : memref<2x16x7x7xf32, #tpu.memory_space<vmem>>, vector<1x1x7x7xf32>
    %140 = vector.shape_cast %139 : vector<1x1x7x7xf32> to vector<7x7xf32>
    %141 = vector.shape_cast %138 : vector<7x7xf32> to vector<1x1x7x7xf32>
    tpu.vector_store %arg4[%c1_119, %c14_120, %c0_121, %c0_122], %141 {strides = array<i32>} : memref<2x16x7x7xf32, #tpu.memory_space<vmem>>, vector<1x1x7x7xf32>,
    %142 = vector.extract_strided_slice %129 {offsets = [0, 21], sizes = [7, 7], strides = [1, 1]} : vector<7x28xf32> to vector<7x7xf32>
    %c1_123 = arith.constant 1 : index
    %c15_124 = arith.constant 15 : index
    %c0_125 = arith.constant 0 : index
    %c0_126 = arith.constant 0 : index
    %143 = vector.load %arg4[%c1_123, %c15_124, %c0_125, %c0_126] : memref<2x16x7x7xf32, #tpu.memory_space<vmem>>, vector<1x1x7x7xf32>
    %144 = vector.shape_cast %143 : vector<1x1x7x7xf32> to vector<7x7xf32>
    %145 = vector.shape_cast %142 : vector<7x7xf32> to vector<1x1x7x7xf32>
    tpu.vector_store %arg4[%c1_123, %c15_124, %c0_125, %c0_126], %145 {strides = array<i32>} : memref<2x16x7x7xf32, #tpu.memory_space<vmem>>, vector<1x1x7x7xf32>,
    return
  }
  func.func @transform_0(%arg0: i32) -> (i32, i32) {
    %c0_i32 = arith.constant 0 : i32
    %c0_i32_0 = arith.constant 0 : i32
    %c0_i32_1 = arith.constant 0 : i32
    return %c0_i32, %c0_i32_0 : i32, i32
  }
  func.func @transform_1(%arg0: i32) -> (i32, i32) {
    %c0_i32 = arith.constant 0 : i32
    %c0_i32_0 = arith.constant 0 : i32
    %c0_i32_1 = arith.constant 0 : i32
    return %c0_i32, %c0_i32_0 : i32, i32
  }
  func.func @transform_2(%arg0: i32) -> (i32, i32, i32, i32) {
    %c0_i32 = arith.constant 0 : i32
    %c0_i32_0 = arith.constant 0 : i32
    %c0_i32_1 = arith.constant 0 : i32
    %c0_i32_2 = arith.constant 0 : i32
    return %arg0, %c0_i32, %c0_i32_0, %c0_i32_1 : i32, i32, i32, i32
  }
  func.func @transform_3(%arg0: i32) -> (i32, i32, i32, i32) {
    %c0_i32 = arith.constant 0 : i32
    %c0_i32_0 = arith.constant 0 : i32
    %c0_i32_1 = arith.constant 0 : i32
    %c0_i32_2 = arith.constant 0 : i32
    return %arg0, %c0_i32, %c0_i32_0, %c0_i32_1 : i32, i32, i32, i32
  }
}

</mosaic_0001>

<llo_original>
// kernel: tpu_custom_call.1
$region0: #{tpu_custom_call.1}
  #allocation0 [shape = 'u32[]', space=smem, size = 0x4, offset = 0x4, fixed_abs, tag = 'smem constant byte address 0x4 - core index']
  #allocation1 [shape = 'u32[72,128]{1,0:T(1,128)}', space=vmem, size = 0x9000, scoped, tag = 'internal scratch']
  %s0 = inlined_call_operand.vmem [shape: f32[28,16], index: 0, kind: input, shape index: {}]
  %s1 = inlined_call_operand.vmem [shape: f32[16,28], index: 1, kind: input, shape index: {}]
  %s2 = inlined_call_operand.vmem [shape: f32[2,1,16,16], index: 2, kind: input, shape index: {}]
  %s3 = inlined_call_operand.vmem [shape: f32[2,16,7,7], index: 3, kind: output, shape index: {}]
  %s4 = sld [smem:[#allocation0]]
  $region22: #{tpu_custom_call.1} parent=0
    _
  %s6 = ssub.s32 1, %s4
  %s7 = scalar_select 0, %s6, %s4
  // Predicated region
  $region2: #{tpu_custom_call.1} parent=0 // pred_check
    _
  $region3: #{tpu_custom_call.1} parent=0 // pred_check_branch
    %9 = sbr.rel (0) target = $region5
  $region4: #{tpu_custom_call.1} parent=0 // pred_region
    _
  $region5: #{tpu_custom_call.1} parent=0 // pred_fallthru
    _
  // Predicated region
  $region6: #{tpu_custom_call.1} parent=0 // pred_check
    _
  $region7: #{tpu_custom_call.1} parent=0 // pred_check_branch
    %11 = sbr.rel (0) target = $region9
  $region8: #{tpu_custom_call.1} parent=0 // pred_region
    _
  $region9: #{tpu_custom_call.1} parent=0 // pred_fallthru
    _
  // Predicated region
  $region10: #{tpu_custom_call.1} parent=0 // pred_check
    _
  $region11: #{tpu_custom_call.1} parent=0 // pred_check_branch
    %13 = sbr.rel (0) target = $region13
  $region12: #{tpu_custom_call.1} parent=0 // pred_region
    _
  $region13: #{tpu_custom_call.1} parent=0 // pred_fallthru
    _
  %v14 = vld [vmem:[%s0] sm:$0xff]
  %v15 = vld [vmem:[%s0 + $0x8] sm:$0xff]
  %v16 = vld [vmem:[%s0 + $0x10] sm:$0xff]
  %v17 = vld [vmem:[%s0 + $0x18] sm:$0xf]
  %v18 = vld [vmem:[%s1] sm:$0xff]
  %v19 = vld [vmem:[%s1 + $0x8] sm:$0xff]
  %v20 = vld [vmem:[%s2] sm:$0xff]
  %v21 = vld [vmem:[%s2 + $0x8] sm:$0xff]
  %vm22 = vcmask 130048
  %v24 = vsel %vm22, %v14, 0
  %v27 = vsel %vm22, %v15, 0
  %v30 = vsel %vm22, %v16, 0
  %v33 = vsel %vm22, %v17, 0
  %35 = vmatpush.msra.mxu0 0.0
  %36 = vmatpush.msra.mxu0 0.0
  %37 = vmatpush.msra.mxu0 0.0
  %38 = vmatpush.msra.mxu0 0.0
  %39 = vmatpush.msra.mxu0 0.0
  %40 = vmatpush.msra.mxu0 0.0
  %41 = vmatpush.msra.mxu0 0.0
  %42 = vmatpush.msra.mxu0 0.0
  %43 = vmatpush.msra.mxu0 0.0
  %44 = vmatpush.msra.mxu0 0.0
  %45 = vmatpush.msra.mxu0 0.0
  %46 = vmatpush.msra.mxu0 0.0
  %47 = vmatpush.msra.mxu0 0.0
  %48 = vmatpush.msra.mxu0 0.0
  %v49 = vand.u32 %v21, 4294901760
  %50 = vmatpush.msra.mxu0 %v49
  %v51 = vand.u32 %v20, 4294901760
  %52 = vmatpush.msra.mxu0 %v51
  %v53 = vand.u32 %v24, 4294901760
  %v54 = vsub.f32 %v24, %v53
  %v55 = vand.u32 %v54, 4294901760
  %v56 = vsub.f32 %v54, %v55
  %v57 = vand.u32 %v56, 4294901760
  %58 = vmatmul.f32.gmra.mxu0 %v57
  %v59 = vpop.f32.mrf.mxu0
  %v60 = vadd.f32 0.0, %v59
  %v61 = vand.u32 %v27, 4294901760
  %v62 = vsub.f32 %v27, %v61
  %v63 = vand.u32 %v62, 4294901760
  %v64 = vsub.f32 %v62, %v63
  %v65 = vand.u32 %v64, 4294901760
  %66 = vmatmul.f32.gmra.mxu0 %v65
  %v67 = vpop.f32.mrf.mxu0
  %v68 = vadd.f32 0.0, %v67
  %v69 = vand.u32 %v30, 4294901760
  %v70 = vsub.f32 %v30, %v69
  %v71 = vand.u32 %v70, 4294901760
  %v72 = vsub.f32 %v70, %v71
  %v73 = vand.u32 %v72, 4294901760
  %74 = vmatmul.f32.gmra.mxu0 %v73
  %v75 = vpop.f32.mrf.mxu0
  %v76 = vadd.f32 0.0, %v75
  %v77 = vand.u32 %v33, 4294901760
  %v78 = vsub.f32 %v33, %v77
  %v79 = vand.u32 %v78, 4294901760
  %v80 = vsub.f32 %v78, %v79
  %v81 = vand.u32 %v80, 4294901760
  %82 = vmatmul.f32.gmra.mxu0 %v81
  %v83 = vpop.f32.mrf.mxu0
  %v84 = vadd.f32 0.0, %v83
  %85 = vdwg.mxu0
  %86 = vmatpush.msra.mxu0 0.0
  %87 = vmatpush.msra.mxu0 0.0
  %88 = vmatpush.msra.mxu0 0.0
  %89 = vmatpush.msra.mxu0 0.0
  %90 = vmatpush.msra.mxu0 0.0
  %91 = vmatpush.msra.mxu0 0.0
  %92 = vmatpush.msra.mxu0 0.0
  %93 = vmatpush.msra.mxu0 0.0
  %94 = vmatpush.msra.mxu0 0.0
  %95 = vmatpush.msra.mxu0 0.0
  %96 = vmatpush.msra.mxu0 0.0
  %97 = vmatpush.msra.mxu0 0.0
  %98 = vmatpush.msra.mxu0 0.0
  %99 = vmatpush.msra.mxu0 0.0
  %v100 = vand.u32 %v21, 4294901760
  %v101 = vsub.f32 %v21, %v100
  %v102 = vand.u32 %v101, 4294901760
  %v103 = vsub.f32 %v101, %v102
  %v104 = vand.u32 %v103, 4294901760
  %105 = vmatpush.msra.mxu0 %v104
  %v106 = vand.u32 %v20, 4294901760
  %v107 = vsub.f32 %v20, %v106
  %v108 = vand.u32 %v107, 4294901760
  %v109 = vsub.f32 %v107, %v108
  %v110 = vand.u32 %v109, 4294901760
  %111 = vmatpush.msra.mxu0 %v110
  %v112 = vand.u32 %v24, 4294901760
  %113 = vmatmul.f32.gmra.mxu0 %v112
  %v114 = vpop.f32.mrf.mxu0
  %v115 = vadd.f32 %v60, %v114
  %v116 = vand.u32 %v27, 4294901760
  %117 = vmatmul.f32.gmra.mxu0 %v116
  %v118 = vpop.f32.mrf.mxu0
  %v119 = vadd.f32 %v68, %v118
  %v120 = vand.u32 %v30, 4294901760
  %121 = vmatmul.f32.gmra.mxu0 %v120
  %v122 = vpop.f32.mrf.mxu0
  %v123 = vadd.f32 %v76, %v122
  %v124 = vand.u32 %v33, 4294901760
  %125 = vmatmul.f32.gmra.mxu0 %v124
  %v126 = vpop.f32.mrf.mxu0
  %v127 = vadd.f32 %v84, %v126
  %128 = vdwg.mxu0
  %129 = vmatpush.msra.mxu0 0.0
  %130 = vmatpush.msra.mxu0 0.0
  %131 = vmatpush.msra.mxu0 0.0
  %132 = vmatpush.msra.mxu0 0.0
  %133 = vmatpush.msra.mxu0 0.0
  %134 = vmatpush.msra.mxu0 0.0
  %135 = vmatpush.msra.mxu0 0.0
  %136 = vmatpush.msra.mxu0 0.0
  %137 = vmatpush.msra.mxu0 0.0
  %138 = vmatpush.msra.mxu0 0.0
  %139 = vmatpush.msra.mxu0 0.0
  %140 = vmatpush.msra.mxu0 0.0
  %141 = vmatpush.msra.mxu0 0.0
  %142 = vmatpush.msra.mxu0 0.0
  %v143 = vand.u32 %v21, 4294901760
  %v144 = vsub.f32 %v21, %v143
  %145 = vmatpush.msra.mxu0 %v144
  %v146 = vand.u32 %v20, 4294901760
  %v147 = vsub.f32 %v20, %v146
  %148 = vmatpush.msra.mxu0 %v147
  %v149 = vand.u32 %v24, 4294901760
  %v150 = vsub.f32 %v24, %v149
  %151 = vmatmul.f32.gmra.mxu0 %v150
  %v152 = vpop.f32.mrf.mxu0
  %v153 = vadd.f32 %v115, %v152
  %v154 = vand.u32 %v27, 4294901760
  %v155 = vsub.f32 %v27, %v154
  %156 = vmatmul.f32.gmra.mxu0 %v155
  %v157 = vpop.f32.mrf.mxu0
  %v158 = vadd.f32 %v119, %v157
  %v159 = vand.u32 %v30, 4294901760
  %v160 = vsub.f32 %v30, %v159
  %161 = vmatmul.f32.gmra.mxu0 %v160
  %v162 = vpop.f32.mrf.mxu0
  %v163 = vadd.f32 %v123, %v162
  %v164 = vand.u32 %v33, 4294901760
  %v165 = vsub.f32 %v33, %v164
  %166 = vmatmul.f32.gmra.mxu0 %v165
  %v167 = vpop.f32.mrf.mxu0
  %v168 = vadd.f32 %v127, %v167
  %169 = vdwg.mxu0
  %170 = vmatpush.msra.mxu0 0.0
  %171 = vmatpush.msra.mxu0 0.0
  %172 = vmatpush.msra.mxu0 0.0
  %173 = vmatpush.msra.mxu0 0.0
  %174 = vmatpush.msra.mxu0 0.0
  %175 = vmatpush.msra.mxu0 0.0
  %176 = vmatpush.msra.mxu0 0.0
  %177 = vmatpush.msra.mxu0 0.0
  %178 = vmatpush.msra.mxu0 0.0
  %179 = vmatpush.msra.mxu0 0.0
  %180 = vmatpush.msra.mxu0 0.0
  %181 = vmatpush.msra.mxu0 0.0
  %182 = vmatpush.msra.mxu0 0.0
  %183 = vmatpush.msra.mxu0 0.0
  %v184 = vand.u32 %v21, 4294901760
  %185 = vmatpush.msra.mxu0 %v184
  %v186 = vand.u32 %v20, 4294901760
  %187 = vmatpush.msra.mxu0 %v186
  %v188 = vand.u32 %v24, 4294901760
  %v189 = vsub.f32 %v24, %v188
  %v190 = vand.u32 %v189, 4294901760
  %191 = vmatmul.f32.gmra.mxu0 %v190
  %v192 = vpop.f32.mrf.mxu0
  %v193 = vadd.f32 %v153, %v192
  %v194 = vand.u32 %v27, 4294901760
  %v195 = vsub.f32 %v27, %v194
  %v196 = vand.u32 %v195, 4294901760
  %197 = vmatmul.f32.gmra.mxu0 %v196
  %v198 = vpop.f32.mrf.mxu0
  %v199 = vadd.f32 %v158, %v198
  %v200 = vand.u32 %v30, 4294901760
  %v201 = vsub.f32 %v30, %v200
  %v202 = vand.u32 %v201, 4294901760
  %203 = vmatmul.f32.gmra.mxu0 %v202
  %v204 = vpop.f32.mrf.mxu0
  %v205 = vadd.f32 %v163, %v204
  %v206 = vand.u32 %v33, 4294901760
  %v207 = vsub.f32 %v33, %v206
  %v208 = vand.u32 %v207, 4294901760
  %209 = vmatmul.f32.gmra.mxu0 %v208
  %v210 = vpop.f32.mrf.mxu0
  %v211 = vadd.f32 %v168, %v210
  %212 = vdwg.mxu0
  %213 = vmatpush.msra.mxu0 0.0
  %214 = vmatpush.msra.mxu0 0.0
  %215 = vmatpush.msra.mxu0 0.0
  %216 = vmatpush.msra.mxu0 0.0
  %217 = vmatpush.msra.mxu0 0.0
  %218 = vmatpush.msra.mxu0 0.0
  %219 = vmatpush.msra.mxu0 0.0
  %220 = vmatpush.msra.mxu0 0.0
  %221 = vmatpush.msra.mxu0 0.0
  %222 = vmatpush.msra.mxu0 0.0
  %223 = vmatpush.msra.mxu0 0.0
  %224 = vmatpush.msra.mxu0 0.0
  %225 = vmatpush.msra.mxu0 0.0
  %226 = vmatpush.msra.mxu0 0.0
  %v227 = vand.u32 %v21, 4294901760
  %v228 = vsub.f32 %v21, %v227
  %v229 = vand.u32 %v228, 4294901760
  %230 = vmatpush.msra.mxu0 %v229
  %v231 = vand.u32 %v20, 4294901760
  %v232 = vsub.f32 %v20, %v231
  %v233 = vand.u32 %v232, 4294901760
  %234 = vmatpush.msra.mxu0 %v233
  %v235 = vand.u32 %v24, 4294901760
  %236 = vmatmul.f32.gmra.mxu0 %v235
  %v237 = vpop.f32.mrf.mxu0
  %v238 = vadd.f32 %v193, %v237
  %v239 = vand.u32 %v27, 4294901760
  %240 = vmatmul.f32.gmra.mxu0 %v239
  %v241 = vpop.f32.mrf.mxu0
  %v242 = vadd.f32 %v199, %v241
  %v243 = vand.u32 %v30, 4294901760
  %244 = vmatmul.f32.gmra.mxu0 %v243
  %v245 = vpop.f32.mrf.mxu0
  %v246 = vadd.f32 %v205, %v245
  %v247 = vand.u32 %v33, 4294901760
  %248 = vmatmul.f32.gmra.mxu0 %v247
  %v249 = vpop.f32.mrf.mxu0
  %v250 = vadd.f32 %v211, %v249
  %251 = vdwg.mxu0
  %252 = vmatpush.msra.mxu0 0.0
  %253 = vmatpush.msra.mxu0 0.0
  %254 = vmatpush.msra.mxu0 0.0
  %255 = vmatpush.msra.mxu0 0.0
  %256 = vmatpush.msra.mxu0 0.0
  %257 = vmatpush.msra.mxu0 0.0
  %258 = vmatpush.msra.mxu0 0.0
  %259 = vmatpush.msra.mxu0 0.0
  %260 = vmatpush.msra.mxu0 0.0
  %261 = vmatpush.msra.mxu0 0.0
  %262 = vmatpush.msra.mxu0 0.0
  %263 = vmatpush.msra.mxu0 0.0
  %264 = vmatpush.msra.mxu0 0.0
  %265 = vmatpush.msra.mxu0 0.0
  %v266 = vand.u32 %v21, 4294901760
  %267 = vmatpush.msra.mxu0 %v266
  %v268 = vand.u32 %v20, 4294901760
  %269 = vmatpush.msra.mxu0 %v268
  %v270 = vand.u32 %v24, 4294901760
  %271 = vmatmul.f32.gmra.mxu0 %v270
  %v272 = vpop.f32.mrf.mxu0
  %v273 = vadd.f32 %v238, %v272
  %v274 = vand.u32 %v27, 4294901760
  %275 = vmatmul.f32.gmra.mxu0 %v274
  %v276 = vpop.f32.mrf.mxu0
  %v277 = vadd.f32 %v242, %v276
  %v278 = vand.u32 %v30, 4294901760
  %279 = vmatmul.f32.gmra.mxu0 %v278
  %v280 = vpop.f32.mrf.mxu0
  %v281 = vadd.f32 %v246, %v280
  %v282 = vand.u32 %v33, 4294901760
  %283 = vmatmul.f32.gmra.mxu0 %v282
  %v284 = vpop.f32.mrf.mxu0
  %v285 = vadd.f32 %v250, %v284
  %286 = vdwg.mxu0
  %v288 = vsel %vm22, %v273, 0
  %v291 = vsel %vm22, %v277, 0
  %v294 = vsel %vm22, %v281, 0
  %v297 = vsel %vm22, %v285, 0
  %299 = vmatpush.msra.mxu0 0.0
  %300 = vmatpush.msra.mxu0 0.0
  %301 = vmatpush.msra.mxu0 0.0
  %302 = vmatpush.msra.mxu0 0.0
  %303 = vmatpush.msra.mxu0 0.0
  %304 = vmatpush.msra.mxu0 0.0
  %305 = vmatpush.msra.mxu0 0.0
  %306 = vmatpush.msra.mxu0 0.0
  %307 = vmatpush.msra.mxu0 0.0
  %308 = vmatpush.msra.mxu0 0.0
  %309 = vmatpush.msra.mxu0 0.0
  %310 = vmatpush.msra.mxu0 0.0
  %311 = vmatpush.msra.mxu0 0.0
  %312 = vmatpush.msra.mxu0 0.0
  %v313 = vand.u32 %v19, 4294901760
  %314 = vmatpush.msra.mxu0 %v313
  %v315 = vand.u32 %v18, 4294901760
  %316 = vmatpush.msra.mxu0 %v315
  %v317 = vand.u32 %v288, 4294901760
  %v318 = vsub.f32 %v288, %v317
  %v319 = vand.u32 %v318, 4294901760
  %v320 = vsub.f32 %v318, %v319
  %v321 = vand.u32 %v320, 4294901760
  %322 = vmatmul.f32.gmra.mxu0 %v321
  %v323 = vpop.f32.mrf.mxu0
  %v324 = vadd.f32 0.0, %v323
  %v325 = vand.u32 %v291, 4294901760
  %v326 = vsub.f32 %v291, %v325
  %v327 = vand.u32 %v326, 4294901760
  %v328 = vsub.f32 %v326, %v327
  %v329 = vand.u32 %v328, 4294901760
  %330 = vmatmul.f32.gmra.mxu0 %v329
  %v331 = vpop.f32.mrf.mxu0
  %v332 = vadd.f32 0.0, %v331
  %v333 = vand.u32 %v294, 4294901760
  %v334 = vsub.f32 %v294, %v333
  %v335 = vand.u32 %v334, 4294901760
  %v336 = vsub.f32 %v334, %v335
  %v337 = vand.u32 %v336, 4294901760
  %338 = vmatmul.f32.gmra.mxu0 %v337
  %v339 = vpop.f32.mrf.mxu0
  %v340 = vadd.f32 0.0, %v339
  %v341 = vand.u32 %v297, 4294901760
  %v342 = vsub.f32 %v297, %v341
  %v343 = vand.u32 %v342, 4294901760
  %v344 = vsub.f32 %v342, %v343
  %v345 = vand.u32 %v344, 4294901760
  %346 = vmatmul.f32.gmra.mxu0 %v345
  %v347 = vpop.f32.mrf.mxu0
  %v348 = vadd.f32 0.0, %v347
  %349 = vdwg.mxu0
  %350 = vmatpush.msra.mxu0 0.0
  %351 = vmatpush.msra.mxu0 0.0
  %352 = vmatpush.msra.mxu0 0.0
  %353 = vmatpush.msra.mxu0 0.0
  %354 = vmatpush.msra.mxu0 0.0
  %355 = vmatpush.msra.mxu0 0.0
  %356 = vmatpush.msra.mxu0 0.0
  %357 = vmatpush.msra.mxu0 0.0
  %358 = vmatpush.msra.mxu0 0.0
  %359 = vmatpush.msra.mxu0 0.0
  %360 = vmatpush.msra.mxu0 0.0
  %361 = vmatpush.msra.mxu0 0.0
  %362 = vmatpush.msra.mxu0 0.0
  %363 = vmatpush.msra.mxu0 0.0
  %v364 = vand.u32 %v19, 4294901760
  %v365 = vsub.f32 %v19, %v364
  %v366 = vand.u32 %v365, 4294901760
  %v367 = vsub.f32 %v365, %v366
  %v368 = vand.u32 %v367, 4294901760
  %369 = vmatpush.msra.mxu0 %v368
  %v370 = vand.u32 %v18, 4294901760
  %v371 = vsub.f32 %v18, %v370
  %v372 = vand.u32 %v371, 4294901760
  %v373 = vsub.f32 %v371, %v372
  %v374 = vand.u32 %v373, 4294901760
  %375 = vmatpush.msra.mxu0 %v374
  %v376 = vand.u32 %v288, 4294901760
  %377 = vmatmul.f32.gmra.mxu0 %v376
  %v378 = vpop.f32.mrf.mxu0
  %v379 = vadd.f32 %v324, %v378
  %v380 = vand.u32 %v291, 4294901760
  %381 = vmatmul.f32.gmra.mxu0 %v380
  %v382 = vpop.f32.mrf.mxu0
  %v383 = vadd.f32 %v332, %v382
  %v384 = vand.u32 %v294, 4294901760
  %385 = vmatmul.f32.gmra.mxu0 %v384
  %v386 = vpop.f32.mrf.mxu0
  %v387 = vadd.f32 %v340, %v386
  %v388 = vand.u32 %v297, 4294901760
  %389 = vmatmul.f32.gmra.mxu0 %v388
  %v390 = vpop.f32.mrf.mxu0
  %v391 = vadd.f32 %v348, %v390
  %392 = vdwg.mxu0
  %393 = vmatpush.msra.mxu0 0.0
  %394 = vmatpush.msra.mxu0 0.0
  %395 = vmatpush.msra.mxu0 0.0
  %396 = vmatpush.msra.mxu0 0.0
  %397 = vmatpush.msra.mxu0 0.0
  %398 = vmatpush.msra.mxu0 0.0
  %399 = vmatpush.msra.mxu0 0.0
  %400 = vmatpush.msra.mxu0 0.0
  %401 = vmatpush.msra.mxu0 0.0
  %402 = vmatpush.msra.mxu0 0.0
  %403 = vmatpush.msra.mxu0 0.0
  %404 = vmatpush.msra.mxu0 0.0
  %405 = vmatpush.msra.mxu0 0.0
  %406 = vmatpush.msra.mxu0 0.0
  %v407 = vand.u32 %v19, 4294901760
  %v408 = vsub.f32 %v19, %v407
  %409 = vmatpush.msra.mxu0 %v408
  %v410 = vand.u32 %v18, 4294901760
  %v411 = vsub.f32 %v18, %v410
  %412 = vmatpush.msra.mxu0 %v411
  %v413 = vand.u32 %v288, 4294901760
  %v414 = vsub.f32 %v288, %v413
  %415 = vmatmul.f32.gmra.mxu0 %v414
  %v416 = vpop.f32.mrf.mxu0
  %v417 = vadd.f32 %v379, %v416
  %v418 = vand.u32 %v291, 4294901760
  %v419 = vsub.f32 %v291, %v418
  %420 = vmatmul.f32.gmra.mxu0 %v419
  %v421 = vpop.f32.mrf.mxu0
  %v422 = vadd.f32 %v383, %v421
  %v423 = vand.u32 %v294, 4294901760
  %v424 = vsub.f32 %v294, %v423
  %425 = vmatmul.f32.gmra.mxu0 %v424
  %v426 = vpop.f32.mrf.mxu0
  %v427 = vadd.f32 %v387, %v426
  %v428 = vand.u32 %v297, 4294901760
  %v429 = vsub.f32 %v297, %v428
  %430 = vmatmul.f32.gmra.mxu0 %v429
  %v431 = vpop.f32.mrf.mxu0
  %v432 = vadd.f32 %v391, %v431
  %433 = vdwg.mxu0
  %434 = vmatpush.msra.mxu0 0.0
  %435 = vmatpush.msra.mxu0 0.0
  %436 = vmatpush.msra.mxu0 0.0
  %437 = vmatpush.msra.mxu0 0.0
  %438 = vmatpush.msra.mxu0 0.0
  %439 = vmatpush.msra.mxu0 0.0
  %440 = vmatpush.msra.mxu0 0.0
  %441 = vmatpush.msra.mxu0 0.0
  %442 = vmatpush.msra.mxu0 0.0
  %443 = vmatpush.msra.mxu0 0.0
  %444 = vmatpush.msra.mxu0 0.0
  %445 = vmatpush.msra.mxu0 0.0
  %446 = vmatpush.msra.mxu0 0.0
  %447 = vmatpush.msra.mxu0 0.0
  %v448 = vand.u32 %v19, 4294901760
  %449 = vmatpush.msra.mxu0 %v448
  %v450 = vand.u32 %v18, 4294901760
  %451 = vmatpush.msra.mxu0 %v450
  %v452 = vand.u32 %v288, 4294901760
  %v453 = vsub.f32 %v288, %v452
  %v454 = vand.u32 %v453, 4294901760
  %455 = vmatmul.f32.gmra.mxu0 %v454
  %v456 = vpop.f32.mrf.mxu0
  %v457 = vadd.f32 %v417, %v456
  %v458 = vand.u32 %v291, 4294901760
  %v459 = vsub.f32 %v291, %v458
  %v460 = vand.u32 %v459, 4294901760
  %461 = vmatmul.f32.gmra.mxu0 %v460
  %v462 = vpop.f32.mrf.mxu0
  %v463 = vadd.f32 %v422, %v462
  %v464 = vand.u32 %v294, 4294901760
  %v465 = vsub.f32 %v294, %v464
  %v466 = vand.u32 %v465, 4294901760
  %467 = vmatmul.f32.gmra.mxu0 %v466
  %v468 = vpop.f32.mrf.mxu0
  %v469 = vadd.f32 %v427, %v468
  %v470 = vand.u32 %v297, 4294901760
  %v471 = vsub.f32 %v297, %v470
  %v472 = vand.u32 %v471, 4294901760
  %473 = vmatmul.f32.gmra.mxu0 %v472
  %v474 = vpop.f32.mrf.mxu0
  %v475 = vadd.f32 %v432, %v474
  %476 = vdwg.mxu0
  %477 = vmatpush.msra.mxu0 0.0
  %478 = vmatpush.msra.mxu0 0.0
  %479 = vmatpush.msra.mxu0 0.0
  %480 = vmatpush.msra.mxu0 0.0
  %481 = vmatpush.msra.mxu0 0.0
  %482 = vmatpush.msra.mxu0 0.0
  %483 = vmatpush.msra.mxu0 0.0
  %484 = vmatpush.msra.mxu0 0.0
  %485 = vmatpush.msra.mxu0 0.0
  %486 = vmatpush.msra.mxu0 0.0
  %487 = vmatpush.msra.mxu0 0.0
  %488 = vmatpush.msra.mxu0 0.0
  %489 = vmatpush.msra.mxu0 0.0
  %490 = vmatpush.msra.mxu0 0.0
  %v491 = vand.u32 %v19, 4294901760
  %v492 = vsub.f32 %v19, %v491
  %v493 = vand.u32 %v492, 4294901760
  %494 = vmatpush.msra.mxu0 %v493
  %v495 = vand.u32 %v18, 4294901760
  %v496 = vsub.f32 %v18, %v495
  %v497 = vand.u32 %v496, 4294901760
  %498 = vmatpush.msra.mxu0 %v497
  %v499 = vand.u32 %v288, 4294901760
  %500 = vmatmul.f32.gmra.mxu0 %v499
  %v501 = vpop.f32.mrf.mxu0
  %v502 = vadd.f32 %v457, %v501
  %v503 = vand.u32 %v291, 4294901760
  %504 = vmatmul.f32.gmra.mxu0 %v503
  %v505 = vpop.f32.mrf.mxu0
  %v506 = vadd.f32 %v463, %v505
  %v507 = vand.u32 %v294, 4294901760
  %508 = vmatmul.f32.gmra.mxu0 %v507
  %v509 = vpop.f32.mrf.mxu0
  %v510 = vadd.f32 %v469, %v509
  %v511 = vand.u32 %v297, 4294901760
  %512 = vmatmul.f32.gmra.mxu0 %v511
  %v513 = vpop.f32.mrf.mxu0
  %v514 = vadd.f32 %v475, %v513
  %515 = vdwg.mxu0
  %516 = vmatpush.msra.mxu0 0.0
  %517 = vmatpush.msra.mxu0 0.0
  %518 = vmatpush.msra.mxu0 0.0
  %519 = vmatpush.msra.mxu0 0.0
  %520 = vmatpush.msra.mxu0 0.0
  %521 = vmatpush.msra.mxu0 0.0
  %522 = vmatpush.msra.mxu0 0.0
  %523 = vmatpush.msra.mxu0 0.0
  %524 = vmatpush.msra.mxu0 0.0
  %525 = vmatpush.msra.mxu0 0.0
  %526 = vmatpush.msra.mxu0 0.0
  %527 = vmatpush.msra.mxu0 0.0
  %528 = vmatpush.msra.mxu0 0.0
  %529 = vmatpush.msra.mxu0 0.0
  %v530 = vand.u32 %v19, 4294901760
  %531 = vmatpush.msra.mxu0 %v530
  %v532 = vand.u32 %v18, 4294901760
  %533 = vmatpush.msra.mxu0 %v532
  %v534 = vand.u32 %v288, 4294901760
  %535 = vmatmul.f32.gmra.mxu0 %v534
  %v536 = vpop.f32.mrf.mxu0
  %v537 = vadd.f32 %v502, %v536
  %v538 = vand.u32 %v291, 4294901760
  %539 = vmatmul.f32.gmra.mxu0 %v538
  %v540 = vpop.f32.mrf.mxu0
  %v541 = vadd.f32 %v506, %v540
  %v542 = vand.u32 %v294, 4294901760
  %543 = vmatmul.f32.gmra.mxu0 %v542
  %v544 = vpop.f32.mrf.mxu0
  %v545 = vadd.f32 %v510, %v544
  %v546 = vand.u32 %v297, 4294901760
  %547 = vmatmul.f32.gmra.mxu0 %v546
  %v548 = vpop.f32.mrf.mxu0
  %v549 = vadd.f32 %v514, %v548
  %550 = vdwg.mxu0
  %vm551 = vcmask 55296
  %552 = vst.msk [vmem:[%s3] sm:$0x7f] %vm551, %v537
  %554 = vrot.lane.b32.xlu0 %v537, 121
  %v555 = vpop.permute.xlu0 %554
  %s557 = scalar_lea.vmem %s3, 8
  %558 = vst.msk [vmem:[%s557] sm:$0x7f] %vm551, %v555
  %559 = vrot.lane.b32.xlu0 %v537, 114
  %v560 = vpop.permute.xlu0 %559
  %s562 = scalar_lea.vmem %s3, 16
  %563 = vst.msk [vmem:[%s562] sm:$0x7f] %vm551, %v560
  %564 = vrot.lane.b32.xlu0 %v537, 107
  %v565 = vpop.permute.xlu0 %564
  %s567 = scalar_lea.vmem %s3, 24
  %568 = vst.msk [vmem:[%s567] sm:$0x7f] %vm551, %v565
  %s569 = scalar_lea.vmem %s3, 32
  %vm570 = vcmask 56327
  %571 = vst.msk [vmem:[%s569 - $0x7] sm:$0x80] %vm570, %v537
  %vm572 = vcmask 54272
  %573 = vst.msk [vmem:[%s569 + $0x1] sm:$0x3f] %vm572, %v541
  %575 = vrot.lane.b32.xlu0 %v541, 121
  %v576 = vpop.permute.xlu0 %575
  %s578 = scalar_lea.vmem %s3, 40
  %579 = vst.msk [vmem:[%s578 - $0x7] sm:$0x80] %vm570, %v555
  %580 = vst.msk [vmem:[%s578 + $0x1] sm:$0x3f] %vm572, %v576
  %581 = vrot.lane.b32.xlu0 %v541, 114
  %v582 = vpop.permute.xlu0 %581
  %s584 = scalar_lea.vmem %s3, 48
  %585 = vst.msk [vmem:[%s584 - $0x7] sm:$0x80] %vm570, %v560
  %586 = vst.msk [vmem:[%s584 + $0x1] sm:$0x3f] %vm572, %v582
  %587 = vrot.lane.b32.xlu0 %v541, 107
  %v588 = vpop.permute.xlu0 %587
  %s590 = scalar_lea.vmem %s3, 56
  %591 = vst.msk [vmem:[%s590 - $0x7] sm:$0x80] %vm570, %v565
  %592 = vst.msk [vmem:[%s590 + $0x1] sm:$0x3f] %vm572, %v588
  %s593 = scalar_lea.vmem %s3, 64
  %vm594 = vcmask 56326
  %595 = vst.msk [vmem:[%s593 - $0x6] sm:$0xc0] %vm594, %v541
  %vm596 = vcmask 53248
  %597 = vst.msk [vmem:[%s593 + $0x2] sm:$0x1f] %vm596, %v545
  %599 = vrot.lane.b32.xlu0 %v545, 121
  %v600 = vpop.permute.xlu0 %599
  %s602 = scalar_lea.vmem %s3, 72
  %603 = vst.msk [vmem:[%s602 - $0x6] sm:$0xc0] %vm594, %v576
  %604 = vst.msk [vmem:[%s602 + $0x2] sm:$0x1f] %vm596, %v600
  %605 = vrot.lane.b32.xlu0 %v545, 114
  %v606 = vpop.permute.xlu0 %605
  %s608 = scalar_lea.vmem %s3, 80
  %609 = vst.msk [vmem:[%s608 - $0x6] sm:$0xc0] %vm594, %v582
  %610 = vst.msk [vmem:[%s608 + $0x2] sm:$0x1f] %vm596, %v606
  %611 = vrot.lane.b32.xlu0 %v545, 107
  %v612 = vpop.permute.xlu0 %611
  %s614 = scalar_lea.vmem %s3, 88
  %615 = vst.msk [vmem:[%s614 - $0x6] sm:$0xc0] %vm594, %v588
  %616 = vst.msk [vmem:[%s614 + $0x2] sm:$0x1f] %vm596, %v612
  %s617 = scalar_lea.vmem %s3, 96
  %vm618 = vcmask 56325
  %619 = vst.msk [vmem:[%s617 - $0x5] sm:$0xe0] %vm618, %v545
  %vm620 = vcmask 52224
  %621 = vst.msk [vmem:[%s617 + $0x3] sm:$0xf] %vm620, %v549
  %623 = vrot.lane.b32.xlu0 %v549, 121
  %v624 = vpop.permute.xlu0 %623
  %s626 = scalar_lea.vmem %s3, 104
  %627 = vst.msk [vmem:[%s626 - $0x5] sm:$0xe0] %vm618, %v600
  %628 = vst.msk [vmem:[%s626 + $0x3] sm:$0xf] %vm620, %v624
  %629 = vrot.lane.b32.xlu0 %v549, 114
  %v630 = vpop.permute.xlu0 %629
  %s632 = scalar_lea.vmem %s3, 112
  %633 = vst.msk [vmem:[%s632 - $0x5] sm:$0xe0] %vm618, %v606
  %634 = vst.msk [vmem:[%s632 + $0x3] sm:$0xf] %vm620, %v630
  %635 = vrot.lane.b32.xlu0 %v549, 107
  %v636 = vpop.permute.xlu0 %635
  %s638 = scalar_lea.vmem %s3, 120
  %639 = vst.msk [vmem:[%s638 - $0x5] sm:$0xe0] %vm618, %v612
  %640 = vst.msk [vmem:[%s638 + $0x3] sm:$0xf] %vm620, %v636
  %s641 = scalar_lea.vmem %s2, 16
  %v642 = vld [vmem:[%s641] sm:$0xff]
  %v643 = vld [vmem:[%s641 + $0x8] sm:$0xff]
  %644 = vmatpush.msra.mxu0 0.0
  %645 = vmatpush.msra.mxu0 0.0
  %646 = vmatpush.msra.mxu0 0.0
  %647 = vmatpush.msra.mxu0 0.0
  %648 = vmatpush.msra.mxu0 0.0
  %649 = vmatpush.msra.mxu0 0.0
  %650 = vmatpush.msra.mxu0 0.0
  %651 = vmatpush.msra.mxu0 0.0
  %652 = vmatpush.msra.mxu0 0.0
  %653 = vmatpush.msra.mxu0 0.0
  %654 = vmatpush.msra.mxu0 0.0
  %655 = vmatpush.msra.mxu0 0.0
  %656 = vmatpush.msra.mxu0 0.0
  %657 = vmatpush.msra.mxu0 0.0
  %v658 = vand.u32 %v643, 4294901760
  %659 = vmatpush.msra.mxu0 %v658
  %v660 = vand.u32 %v642, 4294901760
  %661 = vmatpush.msra.mxu0 %v660
  %v662 = vand.u32 %v24, 4294901760
  %v663 = vsub.f32 %v24, %v662
  %v664 = vand.u32 %v663, 4294901760
  %v665 = vsub.f32 %v663, %v664
  %v666 = vand.u32 %v665, 4294901760
  %667 = vmatmul.f32.gmra.mxu0 %v666
  %v668 = vpop.f32.mrf.mxu0
  %v669 = vadd.f32 0.0, %v668
  %v670 = vand.u32 %v27, 4294901760
  %v671 = vsub.f32 %v27, %v670
  %v672 = vand.u32 %v671, 4294901760
  %v673 = vsub.f32 %v671, %v672
  %v674 = vand.u32 %v673, 4294901760
  %675 = vmatmul.f32.gmra.mxu0 %v674
  %v676 = vpop.f32.mrf.mxu0
  %v677 = vadd.f32 0.0, %v676
  %v678 = vand.u32 %v30, 4294901760
  %v679 = vsub.f32 %v30, %v678
  %v680 = vand.u32 %v679, 4294901760
  %v681 = vsub.f32 %v679, %v680
  %v682 = vand.u32 %v681, 4294901760
  %683 = vmatmul.f32.gmra.mxu0 %v682
  %v684 = vpop.f32.mrf.mxu0
  %v685 = vadd.f32 0.0, %v684
  %v686 = vand.u32 %v33, 4294901760
  %v687 = vsub.f32 %v33, %v686
  %v688 = vand.u32 %v687, 4294901760
  %v689 = vsub.f32 %v687, %v688
  %v690 = vand.u32 %v689, 4294901760
  %691 = vmatmul.f32.gmra.mxu0 %v690
  %v692 = vpop.f32.mrf.mxu0
  %v693 = vadd.f32 0.0, %v692
  %694 = vdwg.mxu0
  %695 = vmatpush.msra.mxu0 0.0
  %696 = vmatpush.msra.mxu0 0.0
  %697 = vmatpush.msra.mxu0 0.0
  %698 = vmatpush.msra.mxu0 0.0
  %699 = vmatpush.msra.mxu0 0.0
  %700 = vmatpush.msra.mxu0 0.0
  %701 = vmatpush.msra.mxu0 0.0
  %702 = vmatpush.msra.mxu0 0.0
  %703 = vmatpush.msra.mxu0 0.0
  %704 = vmatpush.msra.mxu0 0.0
  %705 = vmatpush.msra.mxu0 0.0
  %706 = vmatpush.msra.mxu0 0.0
  %707 = vmatpush.msra.mxu0 0.0
  %708 = vmatpush.msra.mxu0 0.0
  %v709 = vand.u32 %v643, 4294901760
  %v710 = vsub.f32 %v643, %v709
  %v711 = vand.u32 %v710, 4294901760
  %v712 = vsub.f32 %v710, %v711
  %v713 = vand.u32 %v712, 4294901760
  %714 = vmatpush.msra.mxu0 %v713
  %v715 = vand.u32 %v642, 4294901760
  %v716 = vsub.f32 %v642, %v715
  %v717 = vand.u32 %v716, 4294901760
  %v718 = vsub.f32 %v716, %v717
  %v719 = vand.u32 %v718, 4294901760
  %720 = vmatpush.msra.mxu0 %v719
  %v721 = vand.u32 %v24, 4294901760
  %722 = vmatmul.f32.gmra.mxu0 %v721
  %v723 = vpop.f32.mrf.mxu0
  %v724 = vadd.f32 %v669, %v723
  %v725 = vand.u32 %v27, 4294901760
  %726 = vmatmul.f32.gmra.mxu0 %v725
  %v727 = vpop.f32.mrf.mxu0
  %v728 = vadd.f32 %v677, %v727
  %v729 = vand.u32 %v30, 4294901760
  %730 = vmatmul.f32.gmra.mxu0 %v729
  %v731 = vpop.f32.mrf.mxu0
  %v732 = vadd.f32 %v685, %v731
  %v733 = vand.u32 %v33, 4294901760
  %734 = vmatmul.f32.gmra.mxu0 %v733
  %v735 = vpop.f32.mrf.mxu0
  %v736 = vadd.f32 %v693, %v735
  %737 = vdwg.mxu0
  %738 = vmatpush.msra.mxu0 0.0
  %739 = vmatpush.msra.mxu0 0.0
  %740 = vmatpush.msra.mxu0 0.0
  %741 = vmatpush.msra.mxu0 0.0
  %742 = vmatpush.msra.mxu0 0.0
  %743 = vmatpush.msra.mxu0 0.0
  %744 = vmatpush.msra.mxu0 0.0
  %745 = vmatpush.msra.mxu0 0.0
  %746 = vmatpush.msra.mxu0 0.0
  %747 = vmatpush.msra.mxu0 0.0
  %748 = vmatpush.msra.mxu0 0.0
  %749 = vmatpush.msra.mxu0 0.0
  %750 = vmatpush.msra.mxu0 0.0
  %751 = vmatpush.msra.mxu0 0.0
  %v752 = vand.u32 %v643, 4294901760
  %v753 = vsub.f32 %v643, %v752
  %754 = vmatpush.msra.mxu0 %v753
  %v755 = vand.u32 %v642, 4294901760
  %v756 = vsub.f32 %v642, %v755
  %757 = vmatpush.msra.mxu0 %v756
  %v758 = vand.u32 %v24, 4294901760
  %v759 = vsub.f32 %v24, %v758
  %760 = vmatmul.f32.gmra.mxu0 %v759
  %v761 = vpop.f32.mrf.mxu0
  %v762 = vadd.f32 %v724, %v761
  %v763 = vand.u32 %v27, 4294901760
  %v764 = vsub.f32 %v27, %v763
  %765 = vmatmul.f32.gmra.mxu0 %v764
  %v766 = vpop.f32.mrf.mxu0
  %v767 = vadd.f32 %v728, %v766
  %v768 = vand.u32 %v30, 4294901760
  %v769 = vsub.f32 %v30, %v768
  %770 = vmatmul.f32.gmra.mxu0 %v769
  %v771 = vpop.f32.mrf.mxu0
  %v772 = vadd.f32 %v732, %v771
  %v773 = vand.u32 %v33, 4294901760
  %v774 = vsub.f32 %v33, %v773
  %775 = vmatmul.f32.gmra.mxu0 %v774
  %v776 = vpop.f32.mrf.mxu0
  %v777 = vadd.f32 %v736, %v776
  %778 = vdwg.mxu0
  %779 = vmatpush.msra.mxu0 0.0
  %780 = vmatpush.msra.mxu0 0.0
  %781 = vmatpush.msra.mxu0 0.0
  %782 = vmatpush.msra.mxu0 0.0
  %783 = vmatpush.msra.mxu0 0.0
  %784 = vmatpush.msra.mxu0 0.0
  %785 = vmatpush.msra.mxu0 0.0
  %786 = vmatpush.msra.mxu0 0.0
  %787 = vmatpush.msra.mxu0 0.0
  %788 = vmatpush.msra.mxu0 0.0
  %789 = vmatpush.msra.mxu0 0.0
  %790 = vmatpush.msra.mxu0 0.0
  %791 = vmatpush.msra.mxu0 0.0
  %792 = vmatpush.msra.mxu0 0.0
  %v793 = vand.u32 %v643, 4294901760
  %794 = vmatpush.msra.mxu0 %v793
  %v795 = vand.u32 %v642, 4294901760
  %796 = vmatpush.msra.mxu0 %v795
  %v797 = vand.u32 %v24, 4294901760
  %v798 = vsub.f32 %v24, %v797
  %v799 = vand.u32 %v798, 4294901760
  %800 = vmatmul.f32.gmra.mxu0 %v799
  %v801 = vpop.f32.mrf.mxu0
  %v802 = vadd.f32 %v762, %v801
  %v803 = vand.u32 %v27, 4294901760
  %v804 = vsub.f32 %v27, %v803
  %v805 = vand.u32 %v804, 4294901760
  %806 = vmatmul.f32.gmra.mxu0 %v805
  %v807 = vpop.f32.mrf.mxu0
  %v808 = vadd.f32 %v767, %v807
  %v809 = vand.u32 %v30, 4294901760
  %v810 = vsub.f32 %v30, %v809
  %v811 = vand.u32 %v810, 4294901760
  %812 = vmatmul.f32.gmra.mxu0 %v811
  %v813 = vpop.f32.mrf.mxu0
  %v814 = vadd.f32 %v772, %v813
  %v815 = vand.u32 %v33, 4294901760
  %v816 = vsub.f32 %v33, %v815
  %v817 = vand.u32 %v816, 4294901760
  %818 = vmatmul.f32.gmra.mxu0 %v817
  %v819 = vpop.f32.mrf.mxu0
  %v820 = vadd.f32 %v777, %v819
  %821 = vdwg.mxu0
  %822 = vmatpush.msra.mxu0 0.0
  %823 = vmatpush.msra.mxu0 0.0
  %824 = vmatpush.msra.mxu0 0.0
  %825 = vmatpush.msra.mxu0 0.0
  %826 = vmatpush.msra.mxu0 0.0
  %827 = vmatpush.msra.mxu0 0.0
  %828 = vmatpush.msra.mxu0 0.0
  %829 = vmatpush.msra.mxu0 0.0
  %830 = vmatpush.msra.mxu0 0.0
  %831 = vmatpush.msra.mxu0 0.0
  %832 = vmatpush.msra.mxu0 0.0
  %833 = vmatpush.msra.mxu0 0.0
  %834 = vmatpush.msra.mxu0 0.0
  %835 = vmatpush.msra.mxu0 0.0
  %v836 = vand.u32 %v643, 4294901760
  %v837 = vsub.f32 %v643, %v836
  %v838 = vand.u32 %v837, 4294901760
  %839 = vmatpush.msra.mxu0 %v838
  %v840 = vand.u32 %v642, 4294901760
  %v841 = vsub.f32 %v642, %v840
  %v842 = vand.u32 %v841, 4294901760
  %843 = vmatpush.msra.mxu0 %v842
  %v844 = vand.u32 %v24, 4294901760
  %845 = vmatmul.f32.gmra.mxu0 %v844
  %v846 = vpop.f32.mrf.mxu0
  %v847 = vadd.f32 %v802, %v846
  %v848 = vand.u32 %v27, 4294901760
  %849 = vmatmul.f32.gmra.mxu0 %v848
  %v850 = vpop.f32.mrf.mxu0
  %v851 = vadd.f32 %v808, %v850
  %v852 = vand.u32 %v30, 4294901760
  %853 = vmatmul.f32.gmra.mxu0 %v852
  %v854 = vpop.f32.mrf.mxu0
  %v855 = vadd.f32 %v814, %v854
  %v856 = vand.u32 %v33, 4294901760
  %857 = vmatmul.f32.gmra.mxu0 %v856
  %v858 = vpop.f32.mrf.mxu0
  %v859 = vadd.f32 %v820, %v858
  %860 = vdwg.mxu0
  %861 = vmatpush.msra.mxu0 0.0
  %862 = vmatpush.msra.mxu0 0.0
  %863 = vmatpush.msra.mxu0 0.0
  %864 = vmatpush.msra.mxu0 0.0
  %865 = vmatpush.msra.mxu0 0.0
  %866 = vmatpush.msra.mxu0 0.0
  %867 = vmatpush.msra.mxu0 0.0
  %868 = vmatpush.msra.mxu0 0.0
  %869 = vmatpush.msra.mxu0 0.0
  %870 = vmatpush.msra.mxu0 0.0
  %871 = vmatpush.msra.mxu0 0.0
  %872 = vmatpush.msra.mxu0 0.0
  %873 = vmatpush.msra.mxu0 0.0
  %874 = vmatpush.msra.mxu0 0.0
  %v875 = vand.u32 %v643, 4294901760
  %876 = vmatpush.msra.mxu0 %v875
  %v877 = vand.u32 %v642, 4294901760
  %878 = vmatpush.msra.mxu0 %v877
  %v879 = vand.u32 %v24, 4294901760
  %880 = vmatmul.f32.gmra.mxu0 %v879
  %v881 = vpop.f32.mrf.mxu0
  %v882 = vadd.f32 %v847, %v881
  %v883 = vand.u32 %v27, 4294901760
  %884 = vmatmul.f32.gmra.mxu0 %v883
  %v885 = vpop.f32.mrf.mxu0
  %v886 = vadd.f32 %v851, %v885
  %v887 = vand.u32 %v30, 4294901760
  %888 = vmatmul.f32.gmra.mxu0 %v887
  %v889 = vpop.f32.mrf.mxu0
  %v890 = vadd.f32 %v855, %v889
  %v891 = vand.u32 %v33, 4294901760
  %892 = vmatmul.f32.gmra.mxu0 %v891
  %v893 = vpop.f32.mrf.mxu0
  %v894 = vadd.f32 %v859, %v893
  %895 = vdwg.mxu0
  %v897 = vsel %vm22, %v882, 0
  %v900 = vsel %vm22, %v886, 0
  %v903 = vsel %vm22, %v890, 0
  %v906 = vsel %vm22, %v894, 0
  %908 = vmatpush.msra.mxu0 0.0
  %909 = vmatpush.msra.mxu0 0.0
  %910 = vmatpush.msra.mxu0 0.0
  %911 = vmatpush.msra.mxu0 0.0
  %912 = vmatpush.msra.mxu0 0.0
  %913 = vmatpush.msra.mxu0 0.0
  %914 = vmatpush.msra.mxu0 0.0
  %915 = vmatpush.msra.mxu0 0.0
  %916 = vmatpush.msra.mxu0 0.0
  %917 = vmatpush.msra.mxu0 0.0
  %918 = vmatpush.msra.mxu0 0.0
  %919 = vmatpush.msra.mxu0 0.0
  %920 = vmatpush.msra.mxu0 0.0
  %921 = vmatpush.msra.mxu0 0.0
  %v922 = vand.u32 %v19, 4294901760
  %923 = vmatpush.msra.mxu0 %v922
  %v924 = vand.u32 %v18, 4294901760
  %925 = vmatpush.msra.mxu0 %v924
  %v926 = vand.u32 %v897, 4294901760
  %v927 = vsub.f32 %v897, %v926
  %v928 = vand.u32 %v927, 4294901760
  %v929 = vsub.f32 %v927, %v928
  %v930 = vand.u32 %v929, 4294901760
  %931 = vmatmul.f32.gmra.mxu0 %v930
  %v932 = vpop.f32.mrf.mxu0
  %v933 = vadd.f32 0.0, %v932
  %v934 = vand.u32 %v900, 4294901760
  %v935 = vsub.f32 %v900, %v934
  %v936 = vand.u32 %v935, 4294901760
  %v937 = vsub.f32 %v935, %v936
  %v938 = vand.u32 %v937, 4294901760
  %939 = vmatmul.f32.gmra.mxu0 %v938
  %v940 = vpop.f32.mrf.mxu0
  %v941 = vadd.f32 0.0, %v940
  %v942 = vand.u32 %v903, 4294901760
  %v943 = vsub.f32 %v903, %v942
  %v944 = vand.u32 %v943, 4294901760
  %v945 = vsub.f32 %v943, %v944
  %v946 = vand.u32 %v945, 4294901760
  %947 = vmatmul.f32.gmra.mxu0 %v946
  %v948 = vpop.f32.mrf.mxu0
  %v949 = vadd.f32 0.0, %v948
  %v950 = vand.u32 %v906, 4294901760
  %v951 = vsub.f32 %v906, %v950
  %v952 = vand.u32 %v951, 4294901760
  %v953 = vsub.f32 %v951, %v952
  %v954 = vand.u32 %v953, 4294901760
  %955 = vmatmul.f32.gmra.mxu0 %v954
  %v956 = vpop.f32.mrf.mxu0
  %v957 = vadd.f32 0.0, %v956
  %958 = vdwg.mxu0
  %959 = vmatpush.msra.mxu0 0.0
  %960 = vmatpush.msra.mxu0 0.0
  %961 = vmatpush.msra.mxu0 0.0
  %962 = vmatpush.msra.mxu0 0.0
  %963 = vmatpush.msra.mxu0 0.0
  %964 = vmatpush.msra.mxu0 0.0
  %965 = vmatpush.msra.mxu0 0.0
  %966 = vmatpush.msra.mxu0 0.0
  %967 = vmatpush.msra.mxu0 0.0
  %968 = vmatpush.msra.mxu0 0.0
  %969 = vmatpush.msra.mxu0 0.0
  %970 = vmatpush.msra.mxu0 0.0
  %971 = vmatpush.msra.mxu0 0.0
  %972 = vmatpush.msra.mxu0 0.0
  %v973 = vand.u32 %v19, 4294901760
  %v974 = vsub.f32 %v19, %v973
  %v975 = vand.u32 %v974, 4294901760
  %v976 = vsub.f32 %v974, %v975
  %v977 = vand.u32 %v976, 4294901760
  %978 = vmatpush.msra.mxu0 %v977
  %v979 = vand.u32 %v18, 4294901760
  %v980 = vsub.f32 %v18, %v979
  %v981 = vand.u32 %v980, 4294901760
  %v982 = vsub.f32 %v980, %v981
  %v983 = vand.u32 %v982, 4294901760
  %984 = vmatpush.msra.mxu0 %v983
  %v985 = vand.u32 %v897, 4294901760
  %986 = vmatmul.f32.gmra.mxu0 %v985
  %v987 = vpop.f32.mrf.mxu0
  %v988 = vadd.f32 %v933, %v987
  %v989 = vand.u32 %v900, 4294901760
  %990 = vmatmul.f32.gmra.mxu0 %v989
  %v991 = vpop.f32.mrf.mxu0
  %v992 = vadd.f32 %v941, %v991
  %v993 = vand.u32 %v903, 4294901760
  %994 = vmatmul.f32.gmra.mxu0 %v993
  %v995 = vpop.f32.mrf.mxu0
  %v996 = vadd.f32 %v949, %v995
  %v997 = vand.u32 %v906, 4294901760
  %998 = vmatmul.f32.gmra.mxu0 %v997
  %v999 = vpop.f32.mrf.mxu0
  %v1000 = vadd.f32 %v957, %v999
  %1001 = vdwg.mxu0
  %1002 = vmatpush.msra.mxu0 0.0
  %1003 = vmatpush.msra.mxu0 0.0
  %1004 = vmatpush.msra.mxu0 0.0
  %1005 = vmatpush.msra.mxu0 0.0
  %1006 = vmatpush.msra.mxu0 0.0
  %1007 = vmatpush.msra.mxu0 0.0
  %1008 = vmatpush.msra.mxu0 0.0
  %1009 = vmatpush.msra.mxu0 0.0
  %1010 = vmatpush.msra.mxu0 0.0
  %1011 = vmatpush.msra.mxu0 0.0
  %1012 = vmatpush.msra.mxu0 0.0
  %1013 = vmatpush.msra.mxu0 0.0
  %1014 = vmatpush.msra.mxu0 0.0
  %1015 = vmatpush.msra.mxu0 0.0
  %v1016 = vand.u32 %v19, 4294901760
  %v1017 = vsub.f32 %v19, %v1016
  %1018 = vmatpush.msra.mxu0 %v1017
  %v1019 = vand.u32 %v18, 4294901760
  %v1020 = vsub.f32 %v18, %v1019
  %1021 = vmatpush.msra.mxu0 %v1020
  %v1022 = vand.u32 %v897, 4294901760
  %v1023 = vsub.f32 %v897, %v1022
  %1024 = vmatmul.f32.gmra.mxu0 %v1023
  %v1025 = vpop.f32.mrf.mxu0
  %v1026 = vadd.f32 %v988, %v1025
  %v1027 = vand.u32 %v900, 4294901760
  %v1028 = vsub.f32 %v900, %v1027
  %1029 = vmatmul.f32.gmra.mxu0 %v1028
  %v1030 = vpop.f32.mrf.mxu0
  %v1031 = vadd.f32 %v992, %v1030
  %v1032 = vand.u32 %v903, 4294901760
  %v1033 = vsub.f32 %v903, %v1032
  %1034 = vmatmul.f32.gmra.mxu0 %v1033
  %v1035 = vpop.f32.mrf.mxu0
  %v1036 = vadd.f32 %v996, %v1035
  %v1037 = vand.u32 %v906, 4294901760
  %v1038 = vsub.f32 %v906, %v1037
  %1039 = vmatmul.f32.gmra.mxu0 %v1038
  %v1040 = vpop.f32.mrf.mxu0
  %v1041 = vadd.f32 %v1000, %v1040
  %1042 = vdwg.mxu0
  %1043 = vmatpush.msra.mxu0 0.0
  %1044 = vmatpush.msra.mxu0 0.0
  %1045 = vmatpush.msra.mxu0 0.0
  %1046 = vmatpush.msra.mxu0 0.0
  %1047 = vmatpush.msra.mxu0 0.0
  %1048 = vmatpush.msra.mxu0 0.0
  %1049 = vmatpush.msra.mxu0 0.0
  %1050 = vmatpush.msra.mxu0 0.0
  %1051 = vmatpush.msra.mxu0 0.0
  %1052 = vmatpush.msra.mxu0 0.0
  %1053 = vmatpush.msra.mxu0 0.0
  %1054 = vmatpush.msra.mxu0 0.0
  %1055 = vmatpush.msra.mxu0 0.0
  %1056 = vmatpush.msra.mxu0 0.0
  %v1057 = vand.u32 %v19, 4294901760
  %1058 = vmatpush.msra.mxu0 %v1057
  %v1059 = vand.u32 %v18, 4294901760
  %1060 = vmatpush.msra.mxu0 %v1059
  %v1061 = vand.u32 %v897, 4294901760
  %v1062 = vsub.f32 %v897, %v1061
  %v1063 = vand.u32 %v1062, 4294901760
  %1064 = vmatmul.f32.gmra.mxu0 %v1063
  %v1065 = vpop.f32.mrf.mxu0
  %v1066 = vadd.f32 %v1026, %v1065
  %v1067 = vand.u32 %v900, 4294901760
  %v1068 = vsub.f32 %v900, %v1067
  %v1069 = vand.u32 %v1068, 4294901760
  %1070 = vmatmul.f32.gmra.mxu0 %v1069
  %v1071 = vpop.f32.mrf.mxu0
  %v1072 = vadd.f32 %v1031, %v1071
  %v1073 = vand.u32 %v903, 4294901760
  %v1074 = vsub.f32 %v903, %v1073
  %v1075 = vand.u32 %v1074, 4294901760
  %1076 = vmatmul.f32.gmra.mxu0 %v1075
  %v1077 = vpop.f32.mrf.mxu0
  %v1078 = vadd.f32 %v1036, %v1077
  %v1079 = vand.u32 %v906, 4294901760
  %v1080 = vsub.f32 %v906, %v1079
  %v1081 = vand.u32 %v1080, 4294901760
  %1082 = vmatmul.f32.gmra.mxu0 %v1081
  %v1083 = vpop.f32.mrf.mxu0
  %v1084 = vadd.f32 %v1041, %v1083
  %1085 = vdwg.mxu0
  %1086 = vmatpush.msra.mxu0 0.0
  %1087 = vmatpush.msra.mxu0 0.0
  %1088 = vmatpush.msra.mxu0 0.0
  %1089 = vmatpush.msra.mxu0 0.0
  %1090 = vmatpush.msra.mxu0 0.0
  %1091 = vmatpush.msra.mxu0 0.0
  %1092 = vmatpush.msra.mxu0 0.0
  %1093 = vmatpush.msra.mxu0 0.0
  %1094 = vmatpush.msra.mxu0 0.0
  %1095 = vmatpush.msra.mxu0 0.0
  %1096 = vmatpush.msra.mxu0 0.0
  %1097 = vmatpush.msra.mxu0 0.0
  %1098 = vmatpush.msra.mxu0 0.0
  %1099 = vmatpush.msra.mxu0 0.0
  %v1100 = vand.u32 %v19, 4294901760
  %v1101 = vsub.f32 %v19, %v1100
  %v1102 = vand.u32 %v1101, 4294901760
  %1103 = vmatpush.msra.mxu0 %v1102
  %v1104 = vand.u32 %v18, 4294901760
  %v1105 = vsub.f32 %v18, %v1104
  %v1106 = vand.u32 %v1105, 4294901760
  %1107 = vmatpush.msra.mxu0 %v1106
  %v1108 = vand.u32 %v897, 4294901760
  %1109 = vmatmul.f32.gmra.mxu0 %v1108
  %v1110 = vpop.f32.mrf.mxu0
  %v1111 = vadd.f32 %v1066, %v1110
  %v1112 = vand.u32 %v900, 4294901760
  %1113 = vmatmul.f32.gmra.mxu0 %v1112
  %v1114 = vpop.f32.mrf.mxu0
  %v1115 = vadd.f32 %v1072, %v1114
  %v1116 = vand.u32 %v903, 4294901760
  %1117 = vmatmul.f32.gmra.mxu0 %v1116
  %v1118 = vpop.f32.mrf.mxu0
  %v1119 = vadd.f32 %v1078, %v1118
  %v1120 = vand.u32 %v906, 4294901760
  %1121 = vmatmul.f32.gmra.mxu0 %v1120
  %v1122 = vpop.f32.mrf.mxu0
  %v1123 = vadd.f32 %v1084, %v1122
  %1124 = vdwg.mxu0
  %1125 = vmatpush.msra.mxu0 0.0
  %1126 = vmatpush.msra.mxu0 0.0
  %1127 = vmatpush.msra.mxu0 0.0
  %1128 = vmatpush.msra.mxu0 0.0
  %1129 = vmatpush.msra.mxu0 0.0
  %1130 = vmatpush.msra.mxu0 0.0
  %1131 = vmatpush.msra.mxu0 0.0
  %1132 = vmatpush.msra.mxu0 0.0
  %1133 = vmatpush.msra.mxu0 0.0
  %1134 = vmatpush.msra.mxu0 0.0
  %1135 = vmatpush.msra.mxu0 0.0
  %1136 = vmatpush.msra.mxu0 0.0
  %1137 = vmatpush.msra.mxu0 0.0
  %1138 = vmatpush.msra.mxu0 0.0
  %v1139 = vand.u32 %v19, 4294901760
  %1140 = vmatpush.msra.mxu0 %v1139
  %v1141 = vand.u32 %v18, 4294901760
  %1142 = vmatpush.msra.mxu0 %v1141
  %v1143 = vand.u32 %v897, 4294901760
  %1144 = vmatmul.f32.gmra.mxu0 %v1143
  %v1145 = vpop.f32.mrf.mxu0
  %v1146 = vadd.f32 %v1111, %v1145
  %v1147 = vand.u32 %v900, 4294901760
  %1148 = vmatmul.f32.gmra.mxu0 %v1147
  %v1149 = vpop.f32.mrf.mxu0
  %v1150 = vadd.f32 %v1115, %v1149
  %v1151 = vand.u32 %v903, 4294901760
  %1152 = vmatmul.f32.gmra.mxu0 %v1151
  %v1153 = vpop.f32.mrf.mxu0
  %v1154 = vadd.f32 %v1119, %v1153
  %v1155 = vand.u32 %v906, 4294901760
  %1156 = vmatmul.f32.gmra.mxu0 %v1155
  %v1157 = vpop.f32.mrf.mxu0
  %v1158 = vadd.f32 %v1123, %v1157
  %1159 = vdwg.mxu0
  %s1160 = scalar_lea.vmem %s3, 128
  %1161 = vst.msk [vmem:[%s1160] sm:$0x7f] %vm551, %v1146
  %1163 = vrot.lane.b32.xlu0 %v1146, 121
  %v1164 = vpop.permute.xlu0 %1163
  %s1166 = scalar_lea.vmem %s3, 136
  %1167 = vst.msk [vmem:[%s1166] sm:$0x7f] %vm551, %v1164
  %1168 = vrot.lane.b32.xlu0 %v1146, 114
  %v1169 = vpop.permute.xlu0 %1168
  %s1171 = scalar_lea.vmem %s3, 144
  %1172 = vst.msk [vmem:[%s1171] sm:$0x7f] %vm551, %v1169
  %1173 = vrot.lane.b32.xlu0 %v1146, 107
  %v1174 = vpop.permute.xlu0 %1173
  %s1176 = scalar_lea.vmem %s3, 152
  %1177 = vst.msk [vmem:[%s1176] sm:$0x7f] %vm551, %v1174
  %s1178 = scalar_lea.vmem %s3, 160
  %1179 = vst.msk [vmem:[%s1178 - $0x7] sm:$0x80] %vm570, %v1146
  %1180 = vst.msk [vmem:[%s1178 + $0x1] sm:$0x3f] %vm572, %v1150
  %1182 = vrot.lane.b32.xlu0 %v1150, 121
  %v1183 = vpop.permute.xlu0 %1182
  %s1185 = scalar_lea.vmem %s3, 168
  %1186 = vst.msk [vmem:[%s1185 - $0x7] sm:$0x80] %vm570, %v1164
  %1187 = vst.msk [vmem:[%s1185 + $0x1] sm:$0x3f] %vm572, %v1183
  %1188 = vrot.lane.b32.xlu0 %v1150, 114
  %v1189 = vpop.permute.xlu0 %1188
  %s1191 = scalar_lea.vmem %s3, 176
  %1192 = vst.msk [vmem:[%s1191 - $0x7] sm:$0x80] %vm570, %v1169
  %1193 = vst.msk [vmem:[%s1191 + $0x1] sm:$0x3f] %vm572, %v1189
  %1194 = vrot.lane.b32.xlu0 %v1150, 107
  %v1195 = vpop.permute.xlu0 %1194
  %s1197 = scalar_lea.vmem %s3, 184
  %1198 = vst.msk [vmem:[%s1197 - $0x7] sm:$0x80] %vm570, %v1174
  %1199 = vst.msk [vmem:[%s1197 + $0x1] sm:$0x3f] %vm572, %v1195
  %s1200 = scalar_lea.vmem %s3, 192
  %1201 = vst.msk [vmem:[%s1200 - $0x6] sm:$0xc0] %vm594, %v1150
  %1202 = vst.msk [vmem:[%s1200 + $0x2] sm:$0x1f] %vm596, %v1154
  %1204 = vrot.lane.b32.xlu0 %v1154, 121
  %v1205 = vpop.permute.xlu0 %1204
  %s1207 = scalar_lea.vmem %s3, 200
  %1208 = vst.msk [vmem:[%s1207 - $0x6] sm:$0xc0] %vm594, %v1183
  %1209 = vst.msk [vmem:[%s1207 + $0x2] sm:$0x1f] %vm596, %v1205
  %1210 = vrot.lane.b32.xlu0 %v1154, 114
  %v1211 = vpop.permute.xlu0 %1210
  %s1213 = scalar_lea.vmem %s3, 208
  %1214 = vst.msk [vmem:[%s1213 - $0x6] sm:$0xc0] %vm594, %v1189
  %1215 = vst.msk [vmem:[%s1213 + $0x2] sm:$0x1f] %vm596, %v1211
  %1216 = vrot.lane.b32.xlu0 %v1154, 107
  %v1217 = vpop.permute.xlu0 %1216
  %s1219 = scalar_lea.vmem %s3, 216
  %1220 = vst.msk [vmem:[%s1219 - $0x6] sm:$0xc0] %vm594, %v1195
  %1221 = vst.msk [vmem:[%s1219 + $0x2] sm:$0x1f] %vm596, %v1217
  %s1222 = scalar_lea.vmem %s3, 224
  %1223 = vst.msk [vmem:[%s1222 - $0x5] sm:$0xe0] %vm618, %v1154
  %1224 = vst.msk [vmem:[%s1222 + $0x3] sm:$0xf] %vm620, %v1158
  %1226 = vrot.lane.b32.xlu0 %v1158, 121
  %v1227 = vpop.permute.xlu0 %1226
  %s1229 = scalar_lea.vmem %s3, 232
  %1230 = vst.msk [vmem:[%s1229 - $0x5] sm:$0xe0] %vm618, %v1205
  %1231 = vst.msk [vmem:[%s1229 + $0x3] sm:$0xf] %vm620, %v1227
  %1232 = vrot.lane.b32.xlu0 %v1158, 114
  %v1233 = vpop.permute.xlu0 %1232
  %s1235 = scalar_lea.vmem %s3, 240
  %1236 = vst.msk [vmem:[%s1235 - $0x5] sm:$0xe0] %vm618, %v1211
  %1237 = vst.msk [vmem:[%s1235 + $0x3] sm:$0xf] %vm620, %v1233
  %1238 = vrot.lane.b32.xlu0 %v1158, 107
  %v1239 = vpop.permute.xlu0 %1238
  %s1241 = scalar_lea.vmem %s3, 248
  %1242 = vst.msk [vmem:[%s1241 - $0x5] sm:$0xe0] %vm618, %v1217
  %1243 = vst.msk [vmem:[%s1241 + $0x3] sm:$0xf] %vm620, %v1239
  // Predicated region
  $region14: #{tpu_custom_call.1} parent=0 // pred_check
    _
  $region15: #{tpu_custom_call.1} parent=0 // pred_check_branch
    %1245 = sbr.rel (0) target = $region17
  $region16: #{tpu_custom_call.1} parent=0 // pred_region
    _
  $region17: #{tpu_custom_call.1} parent=0 // pred_fallthru
    _
  // Predicated region
  $region18: #{tpu_custom_call.1} parent=0 // pred_check
    _
  $region19: #{tpu_custom_call.1} parent=0 // pred_check_branch
    %1247 = sbr.rel (0) target = $region21
  $region20: #{tpu_custom_call.1} parent=0 // pred_region
    _
  $region21: #{tpu_custom_call.1} parent=0 // pred_fallthru
    _

</llo_original>
